<compile_context>
chip_gen: v7x
topology: tpu7x:2x2x1
jax: 0.10.0
libtpu: 0.0.40
codegen_flags: <defaults>
</compile_context>

<pallas_src>
import functools
import math

import numpy as np
import jax
import jax.numpy as jnp
from jax.experimental import pallas as pl
from jax.experimental.pallas import tpu as pltpu


def _unit_gcn_kernel(x_ref, w_ref, a_ref, b_ref, o_ref, h_ref, *,
                     C_out, K1, LA, G2, cast_dtype):
    # x_ref: (C_in, LT)        lane-dense NCHW slab (time-major, joint-minor lanes)
    # w_ref: (K1*C_out, C_in)  BN-folded stacked 1x1 conv weights (+ down branch)
    # a_ref: (K1*LA, LA)       per-subset block-diagonal adjacency (one lane tile)
    # b_ref: (C_out, 1)        folded conv biases + BN shifts (f32)
    # o_ref: (C_out, LT)       lane-dense NCHW output slab
    # h_ref: VMEM (K1*C_out, LT) f32 scratch: channel-contraction result

    # ---- big, deep (C_in) lane-dense matmul: all K subsets + residual at once ----
    h_ref[...] = jnp.dot(w_ref[...], x_ref[...],
                         preferred_element_type=jnp.float32)

    # ---- apply the per-subset adjacency, one native 128-lane tile at a time ----
    # Each tile is a (C_out, LA) @ (LA, LA) MXU matmul; no relayout, no masked stores.
    for g in range(G2):
        lo = g * LA
        acc = jnp.zeros((C_out, LA), jnp.float32)
        for k in range(K1):
            hk = h_ref[k * C_out:(k + 1) * C_out, lo:lo + LA]
            if cast_dtype is not None:                 # bf16 only at MXU consumption
                hk = hk.astype(cast_dtype)
            acc = acc + jnp.dot(hk, a_ref[k * LA:(k + 1) * LA, :],
                                preferred_element_type=jnp.float32)
        o_ref[:, lo:lo + LA] = jnp.maximum(acc + b_ref[...], 0.0).astype(o_ref.dtype)


def _fold_bn(gamma, beta, mean, var, eps):
    sc = gamma / jnp.sqrt(var + eps)
    return sc, beta - mean * sc


def _vmem_budget_bytes():
    """Generation-aware VMEM budgets: (per-step block budget, vmem_limit_bytes)."""
    phys = 64 * 1024 * 1024                     # conservative default (v7x per-TC VMEM)
    try:
        phys = int(getattr(pltpu.get_tpu_info(), "vmem_capacity_bytes", phys)) or phys
    except Exception:
        pass
    budget = max(8 << 20, (phys * 3) // 8)      # "useful" per-step bytes (~24MiB on v7x)
    limit = min(max(32 << 20, (phys * 3) // 4), 112 << 20)
    return budget, limit


def _pick_lane_tile(total_lanes, N, C_in, C_out, K1, LA, in_item, out_item, budget):
    """Largest lane tile (multiple of LA, divides total_lanes) whose per-step VMEM
    footprint fits the budget, preferring >= 2 total grid steps (v7x has 2 TCs)."""
    def step_bytes(lt):
        x_blk = 2 * C_in * lt * in_item                       # input block, double-buffered
        o_blk = 2 * C_out * lt * out_item                     # output block, double-buffered
        h_scr = 4 * K1 * C_out * lt                           # f32 scratch, single buffer
        consts = 2 * (K1 * C_out * C_in * in_item             # weights
                      + K1 * LA * LA * in_item                # block-diag adjacency
                      + C_out * 4)                            # bias
        return x_blk + o_blk + h_scr + consts

    n_tiles = total_lanes // LA
    cands = [d * LA for d in range(1, n_tiles + 1)
             if n_tiles % d == 0 and step_bytes(d * LA) <= budget]
    if not cands:
        cands = [LA]          # smallest legal tile; vmem_limit still guards the rest
    multi = [lt for lt in cands if N * (total_lanes // lt) >= 2]
    return max(multi) if multi else max(cands)


def unit_gcn_forward(x, PA, Wg, bg, Wd, bd, gcn_bn, down_bn,
                     *, matmul_dtype=jnp.float32):
    """unit_gcn forward pass (inference-mode BN).

    x  : (N, C_in, T, V)       PA : (K, V, V)   adaptive adjacency parameter
    Wg : (K, C_out, C_in)      bg : (K, C_out)  conv_d 1x1 weights / biases
    Wd : (C_out, C_in) or None (None => in_channels == out_channels, down=identity)
    bd : (C_out,)
    gcn_bn / down_bn : (gamma, beta, running_mean, running_var, eps)
    matmul_dtype: jnp.bfloat16 on v6e/v7x for full-rate MXU; f32 scratch/epilogue kept.
    """
    N, C_in, T, V = x.shape
    K, C_out, _ = Wg.shape
    K1 = K + 1

    # ---- per-layer constants, hoisted out of the kernel ----
    An = PA / (jnp.sqrt(jnp.sum(PA * PA, axis=1, keepdims=True)) + 1e-4)  # L2_norm

    gsc, gsh = _fold_bn(*gcn_bn)
    if Wd is None:                       # down = identity (in_channels == out_channels)
        Wd_eff = jnp.eye(C_out, dtype=jnp.float32)
        bd_eff = jnp.zeros((C_out,), jnp.float32)
        dsc = jnp.ones((C_out,), jnp.float32)
        dsh = jnp.zeros((C_out,), jnp.float32)
    else:
        Wd_eff, bd_eff = Wd, bd
        dsc, dsh = _fold_bn(*down_bn)

    # Stacked, BN-folded 1x1 conv weights: rows k-major, o-minor; last block = down.
    W_all = jnp.concatenate([gsc[:, None] * Wg[k] for k in range(K)]
                            + [dsc[:, None] * Wd_eff], axis=0)           # (K1*C_out, C_in)
    bias = gsc * jnp.sum(bg, axis=0) + gsh + dsc * bd_eff + dsh
    bias_col = bias[:, None].astype(jnp.float32)                         # (C_out, 1)

    # ---- lane-friendly padding: Vp power of two, T padded to a whole lane tile ----
    if V <= 128:
        Vp = 1 << max(3, int(math.ceil(math.log2(V))))
    else:
        Vp = ((V + 127) // 128) * 128
    LA = max(Vp, 128)                 # adjacency lane-tile width (multiple of 128)
    G = LA // Vp                      # time steps packed per lane tile
    Tp = ((T + G - 1) // G) * G

    x_pad = jnp.pad(x, ((0, 0), (0, 0), (0, Tp - T), (0, Vp - V)))
    x_flat = x_pad.reshape(N, C_in, Tp * Vp).astype(matmul_dtype)        # lane-dense NCHW

    # Per-subset block-diagonal adjacency for one lane tile: I_G (x) A_k, plus I for
    # the down/residual branch.  Padded joints carry zeros -> contribute nothing.
    An_pad = jnp.pad(An, ((0, 0), (0, Vp - V), (0, Vp - V)))
    eyeG = jnp.eye(G, dtype=An.dtype)
    A_blk = jnp.concatenate([jnp.kron(eyeG, An_pad[k]) for k in range(K)]
                            + [jnp.eye(LA, dtype=An.dtype)], axis=0)     # (K1*LA, LA)

    W_all = W_all.astype(matmul_dtype)
    A_blk = A_blk.astype(matmul_dtype)

    mm_dtype = np.dtype(matmul_dtype)
    cast_dtype = None if mm_dtype == np.dtype(np.float32) else mm_dtype

    # ---- tiling: lane-tile picker with a real byte model + generation-aware budget ----
    total_lanes = Tp * Vp
    budget, vmem_limit = _vmem_budget_bytes()
    LT = _pick_lane_tile(total_lanes, N, C_in, C_out, K1, LA,
                         mm_dtype.itemsize, np.dtype(x.dtype).itemsize, budget)
    G2 = LT // LA
    grid = (N, total_lanes // LT)

    kernel = functools.partial(_unit_gcn_kernel, C_out=C_out, K1=K1, LA=LA, G2=G2,
                               cast_dtype=cast_dtype)

    def build(single_buffer_consts):
        const_kw = {}
        if single_buffer_consts:
            const_kw = dict(pipeline_mode=pl.Buffered(1))   # grid-invariant operands
        in_specs = [
            pl.BlockSpec((None, C_in, LT), lambda n, j: (n, 0, j)),
            pl.BlockSpec((K1 * C_out, C_in), lambda n, j: (0, 0), **const_kw),
            pl.BlockSpec((K1 * LA, LA), lambda n, j: (0, 0), **const_kw),
            pl.BlockSpec((C_out, 1), lambda n, j: (0, 0), **const_kw),
        ]
        out_spec = pl.BlockSpec((None, C_out, LT), lambda n, j: (n, 0, j))
        return pl.pallas_call(
            kernel,
            out_shape=jax.ShapeDtypeStruct((N, C_out, total_lanes), x.dtype),
            grid=grid,
            in_specs=in_specs,
            out_specs=out_spec,
            scratch_shapes=[pltpu.VMEM((K1 * C_out, LT), jnp.float32)],
            compiler_params=pltpu.CompilerParams(
                dimension_semantics=("parallel", "parallel"),
                vmem_limit_bytes=vmem_limit,
            ),
        )

    try:
        out = build(True)(x_flat, W_all, A_blk, bias_col)
    except Exception:
        # pipeline_mode=pl.Buffered(1) not supported on this version -> default buffering.
        out = build(False)(x_flat, W_all, A_blk, bias_col)

    # Free contiguous view back to NCHW, dropping joint/time padding.
    return out.reshape(N, C_out, Tp, Vp)[:, :, :T, :V]


def reference_forward(x, PA, Wg, bg, Wd, bd, gcn_bn, down_bn):
    """Pure-JAX reference mirroring the PyTorch unit_gcn forward (inference BN)."""
    N, C_in, T, V = x.shape
    K, C_out, _ = Wg.shape
    bc = lambda p: p[None, :, None, None]

    An = PA / (jnp.sqrt(jnp.sum(PA * PA, axis=1, keepdims=True)) + 1e-4)
    xf = x.reshape(N, C_in * T, V)
    y = 0.0
    for k in range(K):
        mk = (xf @ An[k]).reshape(N, C_in, T, V)
        y = y + jnp.einsum('oc,nctv->notv', Wg[k], mk) + bc(bg[k])
    gsc, gsh = _fold_bn(*gcn_bn)
    y = y * bc(gsc) + bc(gsh)

    if Wd is None:
        d = x
    else:
        dsc, dsh = _fold_bn(*down_bn)
        d = jnp.einsum('oc,nctv->notv', Wd, x) + bc(bd)
        d = d * bc(dsc) + bc(dsh)
    return jnp.maximum(y + d, 0.0)


if __name__ == "__main__":
    # Small shapes consistent with the module: batch 2, 4 -> 8 channels,
    # T = 8 frames, V = 16 joints, K = 3 adjacency subsets, adaptive=True.
    N, C_in, C_out, T, V, K = 2, 4, 8, 8, 16, 3

    key = jax.random.PRNGKey(0)
    kx, kA, kg, kd = jax.random.split(key, 4)

    x = jax.random.normal(kx, (N, C_in, T, V), jnp.float32)
    PA = jax.random.uniform(kA, (K, V, V), jnp.float32)          # adaptive adjacency PA

    # conv_d[i] (1x1): conv_branch_init -> std = sqrt(2/(C_out*C_in*1*K)), bias 0
    Wg = jax.random.normal(kg, (K, C_out, C_in), jnp.float32) * math.sqrt(
        2.0 / (C_out * C_in * 1 * K))
    bg = jnp.zeros((K, C_out), jnp.float32)
    # down 1x1 conv: kaiming fan_out (= C_out*1*1), bias 0
    Wd = jax.random.normal(kd, (C_out, C_in), jnp.float32) * math.sqrt(2.0 / C_out)
    bd = jnp.zeros((C_out,), jnp.float32)

    # BatchNorm2d, inference mode: running_mean = 0, running_var = 1.
    eps = 1e-5
    zeros = jnp.zeros((C_out,), jnp.float32)
    ones = jnp.ones((C_out,), jnp.float32)
    gcn_bn = (jnp.full((C_out,), 1e-6, jnp.float32), zeros, zeros, ones, eps)  # bn_init(self.bn, 1e-6)
    down_bn = (ones, zeros, zeros, ones, eps)                                   # bn_init(down BN, 1)

    out = unit_gcn_forward(x, PA, Wg, bg, Wd, bd, gcn_bn, down_bn)
    out = jax.block_until_ready(out)

    ref = reference_forward(x, PA, Wg, bg, Wd, bd, gcn_bn, down_bn)
    np.testing.assert_allclose(np.asarray(out), np.asarray(ref), rtol=5e-4, atol=1e-5)

    print("KERNEL_OK")
</pallas_src>

<mosaic_0001>
module attributes {stable_mosaic.version = 11 : i64} {
  func.func @_unit_gcn_kernel(%arg0: i32, %arg1: i32, %arg2: memref<1x4x128xf32, #tpu.memory_space<vmem>>, %arg3: memref<32x4xf32, #tpu.memory_space<vmem>>, %arg4: memref<512x128xf32, #tpu.memory_space<vmem>>, %arg5: memref<8x1xf32, #tpu.memory_space<vmem>>, %arg6: memref<1x8x128xf32, #tpu.memory_space<vmem>>, %arg7: memref<32x128xf32, #tpu.memory_space<vmem>>) attributes {dimension_semantics = [#tpu.dimension_semantics<parallel>, #tpu.dimension_semantics<parallel>], iteration_bounds = array<i64: 2, 1>, scalar_prefetch = 0 : i64, scratch_operands = 1 : i64, tpu.core_type = #tpu.core_type<tc>, window_params = [{transform_indices = @transform_0, window_bounds = array<i64: 1, 4, 128>}, {pipeline_mode = #tpu.pipeline_mode<synchronous>, transform_indices = @transform_1, window_bounds = array<i64: 32, 4>}, {pipeline_mode = #tpu.pipeline_mode<synchronous>, transform_indices = @transform_2, window_bounds = array<i64: 512, 128>}, {pipeline_mode = #tpu.pipeline_mode<synchronous>, transform_indices = @transform_3, window_bounds = array<i64: 8, 1>}, {transform_indices = @transform_4, window_bounds = array<i64: 1, 8, 128>}]} {
    %c0 = arith.constant 0 : index
    %c0_0 = arith.constant 0 : index
    %0 = vector.load %arg3[%c0, %c0_0] : memref<32x4xf32, #tpu.memory_space<vmem>>, vector<32x4xf32>
    %c0_1 = arith.constant 0 : index
    %c0_2 = arith.constant 0 : index
    %c0_3 = arith.constant 0 : index
    %1 = vector.load %arg2[%c0_1, %c0_2, %c0_3] : memref<1x4x128xf32, #tpu.memory_space<vmem>>, vector<1x4x128xf32>
    %2 = vector.shape_cast %1 : vector<1x4x128xf32> to vector<4x128xf32>
    %cst = arith.constant dense<0.000000e+00> : vector<32x128xf32>
    %3 = tpu.matmul %0, %2, %cst {dimension_numbers = #tpu.dot_dimension_numbers<[1], [0], [0], [1], [0, 0, 1, 1], [], []>} : vector<32x4xf32>, vector<4x128xf32>, vector<32x128xf32> -> vector<32x128xf32>
    %c0_4 = arith.constant 0 : index
    %c0_5 = arith.constant 0 : index
    %4 = vector.load %arg7[%c0_4, %c0_5] : memref<32x128xf32, #tpu.memory_space<vmem>>, vector<32x128xf32>
    tpu.vector_store %arg7[%c0_4, %c0_5], %3 {strides = array<i32>} : memref<32x128xf32, #tpu.memory_space<vmem>>, vector<32x128xf32>,
    %cst_6 = arith.constant 0.000000e+00 : f32
    %5 = vector.broadcast %cst_6 : f32 to vector<8x128xf32>
    %c0_7 = arith.constant 0 : index
    %c0_8 = arith.constant 0 : index
    %6 = vector.load %arg7[%c0_7, %c0_8] : memref<32x128xf32, #tpu.memory_space<vmem>>, vector<8x128xf32>
    %c0_9 = arith.constant 0 : index
    %c0_10 = arith.constant 0 : index
    %7 = vector.load %arg4[%c0_9, %c0_10] : memref<512x128xf32, #tpu.memory_space<vmem>>, vector<128x128xf32>
    %cst_11 = arith.constant dense<0.000000e+00> : vector<8x128xf32>
    %8 = tpu.matmul %6, %7, %cst_11 {dimension_numbers = #tpu.dot_dimension_numbers<[1], [0], [0], [1], [0, 0, 1, 1], [], []>} : vector<8x128xf32>, vector<128x128xf32>, vector<8x128xf32> -> vector<8x128xf32>
    %9 = arith.addf %5, %8 : vector<8x128xf32>
    %c8 = arith.constant 8 : index
    %c0_12 = arith.constant 0 : index
    %10 = vector.load %arg7[%c8, %c0_12] : memref<32x128xf32, #tpu.memory_space<vmem>>, vector<8x128xf32>
    %c128 = arith.constant 128 : index
    %c0_13 = arith.constant 0 : index
    %11 = vector.load %arg4[%c128, %c0_13] : memref<512x128xf32, #tpu.memory_space<vmem>>, vector<128x128xf32>
    %cst_14 = arith.constant dense<0.000000e+00> : vector<8x128xf32>
    %12 = tpu.matmul %10, %11, %cst_14 {dimension_numbers = #tpu.dot_dimension_numbers<[1], [0], [0], [1], [0, 0, 1, 1], [], []>} : vector<8x128xf32>, vector<128x128xf32>, vector<8x128xf32> -> vector<8x128xf32>
    %13 = arith.addf %9, %12 : vector<8x128xf32>
    %c16 = arith.constant 16 : index
    %c0_15 = arith.constant 0 : index
    %14 = vector.load %arg7[%c16, %c0_15] : memref<32x128xf32, #tpu.memory_space<vmem>>, vector<8x128xf32>
    %c256 = arith.constant 256 : index
    %c0_16 = arith.constant 0 : index
    %15 = vector.load %arg4[%c256, %c0_16] : memref<512x128xf32, #tpu.memory_space<vmem>>, vector<128x128xf32>
    %cst_17 = arith.constant dense<0.000000e+00> : vector<8x128xf32>
    %16 = tpu.matmul %14, %15, %cst_17 {dimension_numbers = #tpu.dot_dimension_numbers<[1], [0], [0], [1], [0, 0, 1, 1], [], []>} : vector<8x128xf32>, vector<128x128xf32>, vector<8x128xf32> -> vector<8x128xf32>
    %17 = arith.addf %13, %16 : vector<8x128xf32>
    %c24 = arith.constant 24 : index
    %c0_18 = arith.constant 0 : index
    %18 = vector.load %arg7[%c24, %c0_18] : memref<32x128xf32, #tpu.memory_space<vmem>>, vector<8x128xf32>
    %c384 = arith.constant 384 : index
    %c0_19 = arith.constant 0 : index
    %19 = vector.load %arg4[%c384, %c0_19] : memref<512x128xf32, #tpu.memory_space<vmem>>, vector<128x128xf32>
    %cst_20 = arith.constant dense<0.000000e+00> : vector<8x128xf32>
    %20 = tpu.matmul %18, %19, %cst_20 {dimension_numbers = #tpu.dot_dimension_numbers<[1], [0], [0], [1], [0, 0, 1, 1], [], []>} : vector<8x128xf32>, vector<128x128xf32>, vector<8x128xf32> -> vector<8x128xf32>
    %21 = arith.addf %17, %20 : vector<8x128xf32>
    %c0_21 = arith.constant 0 : index
    %c0_22 = arith.constant 0 : index
    %22 = vector.load %arg5[%c0_21, %c0_22] : memref<8x1xf32, #tpu.memory_space<vmem>>, vector<8x1xf32>
    %23 = vector.broadcast %22 : vector<8x1xf32> to vector<8x128xf32>
    %24 = arith.addf %21, %23 : vector<8x128xf32>
    %cst_23 = arith.constant 0.000000e+00 : f32
    %25 = vector.broadcast %cst_23 : f32 to vector<8x128xf32>
    %26 = arith.maximumf %24, %25 : vector<8x128xf32>
    %c0_24 = arith.constant 0 : index
    %c0_25 = arith.constant 0 : index
    %c0_26 = arith.constant 0 : index
    %27 = vector.load %arg6[%c0_24, %c0_25, %c0_26] : memref<1x8x128xf32, #tpu.memory_space<vmem>>, vector<1x8x128xf32>
    %28 = vector.shape_cast %27 : vector<1x8x128xf32> to vector<8x128xf32>
    %29 = vector.shape_cast %26 : vector<8x128xf32> to vector<1x8x128xf32>
    tpu.vector_store %arg6[%c0_24, %c0_25, %c0_26], %29 {strides = array<i32>} : memref<1x8x128xf32, #tpu.memory_space<vmem>>, vector<1x8x128xf32>,
    return
  }
  func.func @transform_0(%arg0: i32, %arg1: i32) -> (i32, i32, i32) {
    %c0_i32 = arith.constant 0 : i32
    %c0_i32_0 = arith.constant 0 : i32
    return %arg0, %c0_i32, %arg1 : i32, i32, i32
  }
  func.func @transform_1(%arg0: i32, %arg1: i32) -> (i32, i32) {
    %c0_i32 = arith.constant 0 : i32
    %c0_i32_0 = arith.constant 0 : i32
    %c0_i32_1 = arith.constant 0 : i32
    return %c0_i32, %c0_i32_0 : i32, i32
  }
  func.func @transform_2(%arg0: i32, %arg1: i32) -> (i32, i32) {
    %c0_i32 = arith.constant 0 : i32
    %c0_i32_0 = arith.constant 0 : i32
    %c0_i32_1 = arith.constant 0 : i32
    return %c0_i32, %c0_i32_0 : i32, i32
  }
  func.func @transform_3(%arg0: i32, %arg1: i32) -> (i32, i32) {
    %c0_i32 = arith.constant 0 : i32
    %c0_i32_0 = arith.constant 0 : i32
    %c0_i32_1 = arith.constant 0 : i32
    return %c0_i32, %c0_i32_0 : i32, i32
  }
  func.func @transform_4(%arg0: i32, %arg1: i32) -> (i32, i32, i32) {
    %c0_i32 = arith.constant 0 : i32
    %c0_i32_0 = arith.constant 0 : i32
    return %arg0, %c0_i32, %arg1 : i32, i32, i32
  }
}

module attributes {stable_mosaic.version = 11 : i64} {
  func.func @_unit_gcn_kernel(%arg0: i32, %arg1: i32, %arg2: memref<1x4x128xf32, #tpu.memory_space<vmem>>, %arg3: memref<32x4xf32, #tpu.memory_space<vmem>>, %arg4: memref<512x128xf32, #tpu.memory_space<vmem>>, %arg5: memref<8x1xf32, #tpu.memory_space<vmem>>, %arg6: memref<1x8x128xf32, #tpu.memory_space<vmem>>, %arg7: memref<32x128xf32, #tpu.memory_space<vmem>>) attributes {dimension_semantics = [#tpu.dimension_semantics<parallel>, #tpu.dimension_semantics<parallel>], iteration_bounds = array<i64: 2, 1>, scalar_prefetch = 0 : i64, scratch_operands = 1 : i64, tpu.core_type = #tpu.core_type<tc>, window_params = [{transform_indices = @transform_0, window_bounds = array<i64: 1, 4, 128>}, {pipeline_mode = #tpu.pipeline_mode<synchronous>, transform_indices = @transform_1, window_bounds = array<i64: 32, 4>}, {pipeline_mode = #tpu.pipeline_mode<synchronous>, transform_indices = @transform_2, window_bounds = array<i64: 512, 128>}, {pipeline_mode = #tpu.pipeline_mode<synchronous>, transform_indices = @transform_3, window_bounds = array<i64: 8, 1>}, {transform_indices = @transform_4, window_bounds = array<i64: 1, 8, 128>}]} {
    %c0 = arith.constant 0 : index
    %c0_0 = arith.constant 0 : index
    %0 = vector.load %arg3[%c0, %c0_0] : memref<32x4xf32, #tpu.memory_space<vmem>>, vector<32x4xf32>
    %c0_1 = arith.constant 0 : index
    %c0_2 = arith.constant 0 : index
    %c0_3 = arith.constant 0 : index
    %1 = vector.load %arg2[%c0_1, %c0_2, %c0_3] : memref<1x4x128xf32, #tpu.memory_space<vmem>>, vector<1x4x128xf32>
    %2 = vector.shape_cast %1 : vector<1x4x128xf32> to vector<4x128xf32>
    %cst = arith.constant dense<0.000000e+00> : vector<32x128xf32>
    %3 = tpu.matmul %0, %2, %cst {dimension_numbers = #tpu.dot_dimension_numbers<[1], [0], [0], [1], [0, 0, 1, 1], [], []>} : vector<32x4xf32>, vector<4x128xf32>, vector<32x128xf32> -> vector<32x128xf32>
    %c0_4 = arith.constant 0 : index
    %c0_5 = arith.constant 0 : index
    %4 = vector.load %arg7[%c0_4, %c0_5] : memref<32x128xf32, #tpu.memory_space<vmem>>, vector<32x128xf32>
    tpu.vector_store %arg7[%c0_4, %c0_5], %3 {strides = array<i32>} : memref<32x128xf32, #tpu.memory_space<vmem>>, vector<32x128xf32>,
    %cst_6 = arith.constant 0.000000e+00 : f32
    %5 = vector.broadcast %cst_6 : f32 to vector<8x128xf32>
    %c0_7 = arith.constant 0 : index
    %c0_8 = arith.constant 0 : index
    %6 = vector.load %arg7[%c0_7, %c0_8] : memref<32x128xf32, #tpu.memory_space<vmem>>, vector<8x128xf32>
    %c0_9 = arith.constant 0 : index
    %c0_10 = arith.constant 0 : index
    %7 = vector.load %arg4[%c0_9, %c0_10] : memref<512x128xf32, #tpu.memory_space<vmem>>, vector<128x128xf32>
    %cst_11 = arith.constant dense<0.000000e+00> : vector<8x128xf32>
    %8 = tpu.matmul %6, %7, %cst_11 {dimension_numbers = #tpu.dot_dimension_numbers<[1], [0], [0], [1], [0, 0, 1, 1], [], []>} : vector<8x128xf32>, vector<128x128xf32>, vector<8x128xf32> -> vector<8x128xf32>
    %9 = arith.addf %5, %8 : vector<8x128xf32>
    %c8 = arith.constant 8 : index
    %c0_12 = arith.constant 0 : index
    %10 = vector.load %arg7[%c8, %c0_12] : memref<32x128xf32, #tpu.memory_space<vmem>>, vector<8x128xf32>
    %c128 = arith.constant 128 : index
    %c0_13 = arith.constant 0 : index
    %11 = vector.load %arg4[%c128, %c0_13] : memref<512x128xf32, #tpu.memory_space<vmem>>, vector<128x128xf32>
    %cst_14 = arith.constant dense<0.000000e+00> : vector<8x128xf32>
    %12 = tpu.matmul %10, %11, %cst_14 {dimension_numbers = #tpu.dot_dimension_numbers<[1], [0], [0], [1], [0, 0, 1, 1], [], []>} : vector<8x128xf32>, vector<128x128xf32>, vector<8x128xf32> -> vector<8x128xf32>
    %13 = arith.addf %9, %12 : vector<8x128xf32>
    %c16 = arith.constant 16 : index
    %c0_15 = arith.constant 0 : index
    %14 = vector.load %arg7[%c16, %c0_15] : memref<32x128xf32, #tpu.memory_space<vmem>>, vector<8x128xf32>
    %c256 = arith.constant 256 : index
    %c0_16 = arith.constant 0 : index
    %15 = vector.load %arg4[%c256, %c0_16] : memref<512x128xf32, #tpu.memory_space<vmem>>, vector<128x128xf32>
    %cst_17 = arith.constant dense<0.000000e+00> : vector<8x128xf32>
    %16 = tpu.matmul %14, %15, %cst_17 {dimension_numbers = #tpu.dot_dimension_numbers<[1], [0], [0], [1], [0, 0, 1, 1], [], []>} : vector<8x128xf32>, vector<128x128xf32>, vector<8x128xf32> -> vector<8x128xf32>
    %17 = arith.addf %13, %16 : vector<8x128xf32>
    %c24 = arith.constant 24 : index
    %c0_18 = arith.constant 0 : index
    %18 = vector.load %arg7[%c24, %c0_18] : memref<32x128xf32, #tpu.memory_space<vmem>>, vector<8x128xf32>
    %c384 = arith.constant 384 : index
    %c0_19 = arith.constant 0 : index
    %19 = vector.load %arg4[%c384, %c0_19] : memref<512x128xf32, #tpu.memory_space<vmem>>, vector<128x128xf32>
    %cst_20 = arith.constant dense<0.000000e+00> : vector<8x128xf32>
    %20 = tpu.matmul %18, %19, %cst_20 {dimension_numbers = #tpu.dot_dimension_numbers<[1], [0], [0], [1], [0, 0, 1, 1], [], []>} : vector<8x128xf32>, vector<128x128xf32>, vector<8x128xf32> -> vector<8x128xf32>
    %21 = arith.addf %17, %20 : vector<8x128xf32>
    %c0_21 = arith.constant 0 : index
    %c0_22 = arith.constant 0 : index
    %22 = vector.load %arg5[%c0_21, %c0_22] : memref<8x1xf32, #tpu.memory_space<vmem>>, vector<8x1xf32>
    %23 = vector.broadcast %22 : vector<8x1xf32> to vector<8x128xf32>
    %24 = arith.addf %21, %23 : vector<8x128xf32>
    %cst_23 = arith.constant 0.000000e+00 : f32
    %25 = vector.broadcast %cst_23 : f32 to vector<8x128xf32>
    %26 = arith.maximumf %24, %25 : vector<8x128xf32>
    %c0_24 = arith.constant 0 : index
    %c0_25 = arith.constant 0 : index
    %c0_26 = arith.constant 0 : index
    %27 = vector.load %arg6[%c0_24, %c0_25, %c0_26] : memref<1x8x128xf32, #tpu.memory_space<vmem>>, vector<1x8x128xf32>
    %28 = vector.shape_cast %27 : vector<1x8x128xf32> to vector<8x128xf32>
    %29 = vector.shape_cast %26 : vector<8x128xf32> to vector<1x8x128xf32>
    tpu.vector_store %arg6[%c0_24, %c0_25, %c0_26], %29 {strides = array<i32>} : memref<1x8x128xf32, #tpu.memory_space<vmem>>, vector<1x8x128xf32>,
    return
  }
  func.func @transform_0(%arg0: i32, %arg1: i32) -> (i32, i32, i32) {
    %c0_i32 = arith.constant 0 : i32
    %c0_i32_0 = arith.constant 0 : i32
    return %arg0, %c0_i32, %arg1 : i32, i32, i32
  }
  func.func @transform_1(%arg0: i32, %arg1: i32) -> (i32, i32) {
    %c0_i32 = arith.constant 0 : i32
    %c0_i32_0 = arith.constant 0 : i32
    %c0_i32_1 = arith.constant 0 : i32
    return %c0_i32, %c0_i32_0 : i32, i32
  }
  func.func @transform_2(%arg0: i32, %arg1: i32) -> (i32, i32) {
    %c0_i32 = arith.constant 0 : i32
    %c0_i32_0 = arith.constant 0 : i32
    %c0_i32_1 = arith.constant 0 : i32
    return %c0_i32, %c0_i32_0 : i32, i32
  }
  func.func @transform_3(%arg0: i32, %arg1: i32) -> (i32, i32) {
    %c0_i32 = arith.constant 0 : i32
    %c0_i32_0 = arith.constant 0 : i32
    %c0_i32_1 = arith.constant 0 : i32
    return %c0_i32, %c0_i32_0 : i32, i32
  }
  func.func @transform_4(%arg0: i32, %arg1: i32) -> (i32, i32, i32) {
    %c0_i32 = arith.constant 0 : i32
    %c0_i32_0 = arith.constant 0 : i32
    return %arg0, %c0_i32, %arg1 : i32, i32, i32
  }
}

</mosaic_0001>

<llo_original>
// kernel: tpu_custom_call.1
$region0: #{tpu_custom_call.1}
  #allocation0 [shape = 'u32[]', space=smem, size = 0x4, offset = 0x4, fixed_abs, tag = 'smem constant byte address 0x4 - core index']
  #allocation1 [shape = 'u32[144,128]{1,0:T(1,128)}', space=vmem, size = 0x12000, scoped, tag = 'internal scratch']
  #allocation2 [shape = 'f32[32,128]{1,0:T(8,128)}', space=vmem, size = 0x4000, scoped, tag = 'scratch operand']
  %s0 = inlined_call_operand.vmem [shape: f32[2,4,128], index: 0, kind: input, shape index: {}]
  %s1 = inlined_call_operand.vmem [shape: f32[32,4], index: 1, kind: input, shape index: {}]
  %s2 = inlined_call_operand.hbm [shape: f32[512,128], index: 2, kind: input, shape index: {}]
  %s3 = inlined_call_operand.vmem [shape: f32[8,1], index: 3, kind: input, shape index: {}]
  %s4 = inlined_call_operand.hbm [shape: f32[2,8,128], index: 4, kind: output, shape index: {}]
  %s5 = sld [smem:[#allocation0]]
  $region53: #{tpu_custom_call.1} parent=0
    _
  %s7 = ssub.s32 1, %s5
  %s8 = scalar_select 0, %s7, %s5
  $region1: #{tpu_custom_call.1} parent=0
    #allocation3 [shape = 'u8[262144]{0}', space=vmem, size = 0x40000, scoped, tag = 'input window, operand 2, single buffered']
    #allocation4 [shape = 's32[2]{0}', space=sflag, size = 0x8, scoped, tag = 'scoped memory for tpu_custom_call.1']
    #allocation5 [shape = 's32[2]{0}', space=sflag, size = 0x8, scoped, tag = 'scoped memory for tpu_custom_call.1']
    #allocation6 [shape = 'u8[8192]{0}', space=vmem, size = 0x2000, scoped, tag = 'output window, operand 0']
    %9 = vsyncpa [#allocation4], 0
    %10 = vsyncpa [#allocation5], 0
    %s11 = scalar_lea.sflag [#allocation5], 1
    %12 = vsyncpa %s11, 0
    loop: start=0, step=1, limit=4
    $region2: #{tpu_custom_call.1} parent=1 // loop_pre_header
      _
    $region3: #{tpu_custom_call.1} parent=1 // loop_header
      %s14 = sphi 0, %s18
      %p15 = scmp.ge.s32.totalorder %s14, 4
      %s21 = sphi 0, %s33
      %s22 = sphi 0, %s29
      %s23 = sphi 0, %s21
      %s24 = sphi 0, %s22
      %s25 = sphi 0, %s23
      %s26 = sphi 0, %s24
      %s38 = sphi 0, %s40
      %s41 = sphi 0, %s38
      %s42 = sphi 0, %s41
      %s58 = sphi 0, %s42
      %s62 = sphi 0, %s62
      %s64 = sphi 0, %s62
      %s65 = sphi 0, %s64
      %s79 = sphi 0, %s65
      %s83 = sphi 0, %s83
      %s85 = sphi 0, %s83
      %s86 = sphi 0, %s85
      %s100 = sphi 0, %s86
      %s104 = sphi 0, %s104
      %s106 = sphi 0, %s104
      %s107 = sphi 0, %s106
      %s121 = sphi 0, %s107
      %s129 = sphi 0, %s131
      %s132 = sphi 0, %s129
      %s133 = sphi 0, %s132
      %s149 = sphi 0, %s133
    $region4: #{tpu_custom_call.1} parent=1 // loop_header_branch
      %17 = sbr.rel (%p15) target = $region8
    $region5: #{tpu_custom_call.1} parent=1 // loop_body
      %s19 = ssub.s32 %s14, 1
      %s20 = ssub.s32 %s14, 2
      %s27 = sadd.s32 1, %s22
      %p28 = scmp.ge.s32.totalorder %s27, 1
      %s29 = scalar_select %p28, 0, %s27
      %s30 = sadd.s32 1, %s21
      %s31 = scalar_select %p28, %s30, %s21
      %p32 = scmp.ge.s32.totalorder %s31, 2
      %s33 = scalar_select %p32, 0, %s31
      %s34 = ssub.s32 %s21, %s33
      %s35 = ssub.s32 %s22, %s29
      %s36 = sor.u32 %s34, %s35
      %p37 = scmp.eq.s32.totalorder %s36, 0
      %s39 = sadd.s32 %s38, 1
      %s40 = scalar_select %p37, %s38, %s39
      %p43 = pneg %p37
      %p44 = scmp.eq.s32.totalorder %s14, 1
      %p45 = por %p43, %p44
      %p46 = scmp.ne.s32.totalorder %s38, %s41
      %p47 = scmp.eq.s32.totalorder %s14, 0
      %p48 = por %p46, %p47
      %p49 = scmp.ne.s32.totalorder %s38, %s41
      %p50 = scmp.eq.s32.totalorder %s19, 1
      %p51 = por %p49, %p50
      %p52 = scmp.ne.s32.totalorder %s41, %s42
      %p53 = scmp.eq.s32.totalorder %s19, 0
      %p54 = por %p52, %p53
      %p55 = scmp.ne.s32.totalorder %s41, %s42
      %p56 = scmp.eq.s32.totalorder %s20, 1
      %p57 = por %p55, %p56
      %p59 = scmp.ne.s32.totalorder %s42, %s58
      %p60 = scmp.eq.s32.totalorder %s20, 0
      %p61 = por %p59, %p60
      %s63 = sadd.s32 %s62, 1
      %p66 = scmp.eq.s32.totalorder %s14, 1
      %p67 = scmp.ne.s32.totalorder %s62, %s64
      %p68 = scmp.eq.s32.totalorder %s14, 0
      %p69 = por %p67, %p68
      %p70 = scmp.ne.s32.totalorder %s62, %s64
      %p71 = scmp.eq.s32.totalorder %s19, 1
      %p72 = por %p70, %p71
      %p73 = scmp.ne.s32.totalorder %s64, %s65
      %p74 = scmp.eq.s32.totalorder %s19, 0
      %p75 = por %p73, %p74
      %p76 = scmp.ne.s32.totalorder %s64, %s65
      %p77 = scmp.eq.s32.totalorder %s20, 1
      %p78 = por %p76, %p77
      %p80 = scmp.ne.s32.totalorder %s65, %s79
      %p81 = scmp.eq.s32.totalorder %s20, 0
      %p82 = por %p80, %p81
      %s84 = sadd.s32 %s83, 1
      %p87 = scmp.eq.s32.totalorder %s14, 1
      %p88 = scmp.ne.s32.totalorder %s83, %s85
      %p89 = scmp.eq.s32.totalorder %s14, 0
      %p90 = por %p88, %p89
      %p91 = scmp.ne.s32.totalorder %s83, %s85
      %p92 = scmp.eq.s32.totalorder %s19, 1
      %p93 = por %p91, %p92
      %p94 = scmp.ne.s32.totalorder %s85, %s86
      %p95 = scmp.eq.s32.totalorder %s19, 0
      %p96 = por %p94, %p95
      %p97 = scmp.ne.s32.totalorder %s85, %s86
      %p98 = scmp.eq.s32.totalorder %s20, 1
      %p99 = por %p97, %p98
      %p101 = scmp.ne.s32.totalorder %s86, %s100
      %p102 = scmp.eq.s32.totalorder %s20, 0
      %p103 = por %p101, %p102
      %s105 = sadd.s32 %s104, 1
      %p108 = scmp.eq.s32.totalorder %s14, 1
      %p109 = scmp.ne.s32.totalorder %s104, %s106
      %p110 = scmp.eq.s32.totalorder %s14, 0
      %p111 = por %p109, %p110
      %p112 = scmp.ne.s32.totalorder %s104, %s106
      %p113 = scmp.eq.s32.totalorder %s19, 1
      %p114 = por %p112, %p113
      %p115 = scmp.ne.s32.totalorder %s106, %s107
      %p116 = scmp.eq.s32.totalorder %s19, 0
      %p117 = por %p115, %p116
      %p118 = scmp.ne.s32.totalorder %s106, %s107
      %p119 = scmp.eq.s32.totalorder %s20, 1
      %p120 = por %p118, %p119
      %p122 = scmp.ne.s32.totalorder %s107, %s121
      %p123 = scmp.eq.s32.totalorder %s20, 0
      %p124 = por %p122, %p123
      %s125 = ssub.s32 %s21, %s33
      %s126 = ssub.s32 %s22, %s29
      %s127 = sor.u32 %s125, %s126
      %p128 = scmp.eq.s32.totalorder %s127, 0
      %s130 = sadd.s32 %s129, 1
      %s131 = scalar_select %p128, %s129, %s130
      %p134 = pneg %p128
      %p135 = scmp.eq.s32.totalorder %s14, 1
      %p136 = por %p134, %p135
      %p137 = scmp.ne.s32.totalorder %s129, %s132
      %p138 = scmp.eq.s32.totalorder %s14, 0
      %p139 = por %p137, %p138
      %p140 = scmp.ne.s32.totalorder %s129, %s132
      %p141 = scmp.eq.s32.totalorder %s19, 1
      %p142 = por %p140, %p141
      %p143 = scmp.ne.s32.totalorder %s132, %s133
      %p144 = scmp.eq.s32.totalorder %s19, 0
      %p145 = por %p143, %p144
      %p146 = scmp.ne.s32.totalorder %s132, %s133
      %p147 = scmp.eq.s32.totalorder %s20, 1
      %p148 = por %p146, %p147
      %p150 = scmp.ne.s32.totalorder %s133, %s149
      %p151 = scmp.eq.s32.totalorder %s20, 0
      %p152 = por %p150, %p151
      %p153 = scmp.le.s32.totalorder 1, %s14
      %p154 = scmp.lt.s32.totalorder %s14, 3
      %p155 = pnand %p153, %p154
      %p156 = pneg %p155
      // Predicated region
      $region9: #{tpu_custom_call.1} parent=5 // pred_check
        _
      $region10: #{tpu_custom_call.1} parent=5 // pred_check_branch
        %158 = sbr.rel (%p155) target = $region12
      $region11: #{tpu_custom_call.1} parent=5 // pred_region
        %s159 = ssub.s32 %s14, 1
        // Predicated region
        $region13: #{tpu_custom_call.1} parent=11 // pred_check
          %p160 = pneg %p75
        $region14: #{tpu_custom_call.1} parent=11 // pred_check_branch
          %162 = sbr.rel (%p160) target = $region16
        $region15: #{tpu_custom_call.1} parent=11 // pred_region
          _
        $region16: #{tpu_custom_call.1} parent=11 // pred_fallthru
          _
        // Predicated region
        $region17: #{tpu_custom_call.1} parent=11 // pred_check
          %p163 = pneg %p96
        $region18: #{tpu_custom_call.1} parent=11 // pred_check_branch
          %165 = sbr.rel (%p163) target = $region20
        $region19: #{tpu_custom_call.1} parent=11 // pred_region
          %s167 = ssub.s32 8192, 8192
          %168 = vsyncadd [#allocation4], %s167
          %s169 = sshll.u32 [#allocation3], 4
          %s170 = int_to_ptr.vmem [resolvable:$true] %s169
          %175 = dma.hbm_to_vmem [thread:$0]  %s2, 8192, %s170, [#allocation4], 128, 128, 8
        $region20: #{tpu_custom_call.1} parent=11 // pred_fallthru
          _
        // Predicated region
        $region21: #{tpu_custom_call.1} parent=11 // pred_check
          %p176 = pneg %p117
        $region22: #{tpu_custom_call.1} parent=11 // pred_check_branch
          %178 = sbr.rel (%p176) target = $region24
        $region23: #{tpu_custom_call.1} parent=11 // pred_region
          _
        $region24: #{tpu_custom_call.1} parent=11 // pred_fallthru
          _
      $region12: #{tpu_custom_call.1} parent=5 // pred_fallthru
        _
      %p179 = scmp.lt.s32.totalorder %s14, 2
      // Predicated region
      $region25: #{tpu_custom_call.1} parent=5 // pred_check
        %p180 = pneg %p179
      $region26: #{tpu_custom_call.1} parent=5 // pred_check_branch
        %182 = sbr.rel (%p180) target = $region28
      $region27: #{tpu_custom_call.1} parent=5 // pred_region
        // Predicated region
        $region29: #{tpu_custom_call.1} parent=27 // pred_check
          %p183 = pneg %p48
        $region30: #{tpu_custom_call.1} parent=27 // pred_check_branch
          %185 = sbr.rel (%p183) target = $region32
        $region31: #{tpu_custom_call.1} parent=27 // pred_region
          %p186 = scmp.lt.s32.totalorder %s21, 1
          %s187 = scalar_select %p186, %s21, 1
          %p188 = scmp.lt.s32.totalorder %s22, 0
          %s189 = scalar_select %p188, %s22, 0
          %s190 = sadd.s32 %s189, %s187
          %s191 = smul.addr %s190, 4
          %s192 = scalar_lea.vmem %s0, %s191
        $region32: #{tpu_custom_call.1} parent=27 // pred_fallthru
          _
      $region28: #{tpu_custom_call.1} parent=5 // pred_fallthru
        _
      %p193 = scmp.le.s32.totalorder 1, %s14
      %p194 = scmp.lt.s32.totalorder %s14, 3
      %p195 = pnand %p193, %p194
      %p196 = pneg %p195
      // Predicated region
      $region33: #{tpu_custom_call.1} parent=5 // pred_check
        _
      $region34: #{tpu_custom_call.1} parent=5 // pred_check_branch
        %198 = sbr.rel (%p195) target = $region36
      $region35: #{tpu_custom_call.1} parent=5 // pred_region
        %s199 = ssub.s32 %s14, 1
        // Predicated region
        $region37: #{tpu_custom_call.1} parent=35 // pred_check
          %p200 = pneg %p96
        $region38: #{tpu_custom_call.1} parent=35 // pred_check_branch
          %202 = sbr.rel (%p200) target = $region40
        $region39: #{tpu_custom_call.1} parent=35 // pred_region
          %203 = dma.done [#allocation4], 8192
        $region40: #{tpu_custom_call.1} parent=35 // pred_fallthru
          _
        %p204 = scmp.lt.s32.totalorder %s23, 1
        %s205 = scalar_select %p204, %s23, 1
        %p206 = scmp.lt.s32.totalorder %s24, 0
        %s207 = scalar_select %p206, %s24, 0
        %s208 = sadd.s32 %s207, %s205
        %s209 = smul.addr %s208, 4
        %s210 = scalar_lea.vmem %s0, %s209
        %p211 = pneg %p54
        %p212 = pneg %p51
        %p213 = pneg %p75
        %p214 = pneg %p72
        %p215 = pneg %p96
        %p216 = pneg %p93
        %p217 = pneg %p117
        %p218 = pneg %p114
        %p219 = pneg %p145
        %p220 = pneg %p142
        %s221 = sand.u32 %s132, 1
        %s222 = scalar_lea.sflag [#allocation5], %s221
        %s223 = sand.u32 %s132, 1
        %s224 = smul.addr %s223, 8
        %s225 = scalar_lea.vmem [#allocation6], %s224
        %p226 = scmp.lt.s32.totalorder %s23, 1
        %s227 = scalar_select %p226, %s23, 1
        %p228 = scmp.lt.s32.totalorder %s24, 0
        %s229 = scalar_select %p228, %s24, 0
        %s230 = sadd.s32 %s229, %s227
        %s231 = smul.addr %s230, 4
        %s232 = scalar_lea.vmem %s0, %s231
        %v233 = vld [vmem:[%s1] sm:$0xff]
        %v234 = vld [vmem:[%s1 + $0x8] sm:$0xff]
        %v235 = vld [vmem:[%s1 + $0x10] sm:$0xff]
        %v236 = vld [vmem:[%s1 + $0x18] sm:$0xff]
        %v237 = vld [vmem:[%s232] sm:$0xf]
        %vm238 = vcmask 31744
        %v240 = vsel %vm238, %v233, 0
        %v243 = vsel %vm238, %v234, 0
        %v246 = vsel %vm238, %v235, 0
        %v249 = vsel %vm238, %v236, 0
        %vm251 = vcmask 1043456
        %v253 = vsel %vm251, %v237, 0
        %255 = vmatprep.subr.mxu0 0.0
        %256 = vmatpush1.msra.mxu0 %v253
        %257 = vmatprep.subr.mxu0 0.0
        %258 = vmatpush1.msra.mxu0 0.0
        %259 = vmatprep.subr.mxu0 0.0
        %260 = vmatpush1.msra.mxu0 0.0
        %261 = vmatprep.subr.mxu0 0.0
        %262 = vmatpush1.msra.mxu0 0.0
        %263 = vmatprep.subr.mxu0 0.0
        %264 = vmatpush1.msra.mxu0 0.0
        %265 = vmatprep.subr.mxu0 0.0
        %266 = vmatpush1.msra.mxu0 0.0
        %267 = vmatprep.subr.mxu0 0.0
        %268 = vmatpush1.msra.mxu0 0.0
        %269 = vmatprep.subr.mxu0 0.0
        %270 = vmatpush1.msra.mxu0 0.0
        %271 = vmatprep.subr.mxu0 0.0
        %272 = vmatpush1.msra.mxu0 0.0
        %273 = vmatprep.subr.mxu0 0.0
        %274 = vmatpush1.msra.mxu0 0.0
        %275 = vmatprep.subr.mxu0 0.0
        %276 = vmatpush1.msra.mxu0 0.0
        %277 = vmatprep.subr.mxu0 0.0
        %278 = vmatpush1.msra.mxu0 0.0
        %279 = vmatprep.subr.mxu0 0.0
        %280 = vmatpush1.msra.mxu0 0.0
        %281 = vmatprep.subr.mxu0 0.0
        %282 = vmatpush1.msra.mxu0 0.0
        %283 = vmatprep.subr.mxu0 0.0
        %284 = vmatpush1.msra.mxu0 0.0
        %285 = vmatprep.subr.mxu0 0.0
        %286 = vmatpush1.msra.mxu0 0.0
        %287 = vmatprep.subr.mxu0 0.0
        %288 = vmatpush1.msra.mxu0 0.0
        %289 = vmatprep.subr.mxu0 0.0
        %290 = vmatpush1.msra.mxu0 0.0
        %291 = vmatprep.subr.mxu0 0.0
        %292 = vmatpush1.msra.mxu0 0.0
        %293 = vmatprep.subr.mxu0 0.0
        %294 = vmatpush1.msra.mxu0 0.0
        %295 = vmatprep.subr.mxu0 0.0
        %296 = vmatpush1.msra.mxu0 0.0
        %297 = vmatprep.subr.mxu0 0.0
        %298 = vmatpush1.msra.mxu0 0.0
        %299 = vmatprep.subr.mxu0 0.0
        %300 = vmatpush1.msra.mxu0 0.0
        %301 = vmatprep.subr.mxu0 0.0
        %302 = vmatpush1.msra.mxu0 0.0
        %303 = vmatprep.subr.mxu0 0.0
        %304 = vmatpush1.msra.mxu0 0.0
        %305 = vmatprep.subr.mxu0 0.0
        %306 = vmatpush1.msra.mxu0 0.0
        %307 = vmatprep.subr.mxu0 0.0
        %308 = vmatpush1.msra.mxu0 0.0
        %309 = vmatprep.subr.mxu0 0.0
        %310 = vmatpush1.msra.mxu0 0.0
        %311 = vmatprep.subr.mxu0 0.0
        %312 = vmatpush1.msra.mxu0 0.0
        %313 = vmatprep.subr.mxu0 0.0
        %314 = vmatpush1.msra.mxu0 0.0
        %315 = vmatprep.subr.mxu0 0.0
        %316 = vmatpush1.msra.mxu0 0.0
        %317 = vmatprep.subr.mxu0 0.0
        %318 = vmatpush1.msra.mxu0 0.0
        %319 = vmatprep.mubr.f32.mxu0 0.0
        %320 = vmatmul.mubr.f32.gmra.mrb[0].mxu0 %v240
        %v321 = vpop.f32.mrb[0].mxu0
        %v322 = vadd.f32 0.0, %v321
        %v323 = vpop.f32.mrb[0].mxu0
        %324 = vmatprep.mubr.f32.mxu0 0.0
        %325 = vmatmul.mubr.f32.gmra.mrb[0].mxu0 %v243
        %v326 = vpop.f32.mrb[0].mxu0
        %v327 = vadd.f32 0.0, %v326
        %v328 = vpop.f32.mrb[0].mxu0
        %329 = vmatprep.mubr.f32.mxu0 0.0
        %330 = vmatmul.mubr.f32.gmra.mrb[0].mxu0 %v246
        %v331 = vpop.f32.mrb[0].mxu0
        %v332 = vadd.f32 0.0, %v331
        %v333 = vpop.f32.mrb[0].mxu0
        %334 = vmatprep.mubr.f32.mxu0 0.0
        %335 = vmatmul.mubr.f32.gmra.mrb[0].mxu0 %v249
        %v336 = vpop.f32.mrb[0].mxu0
        %v337 = vadd.f32 0.0, %v336
        %v338 = vpop.f32.mrb[0].mxu0
        %339 = vdwg.mxu0
        %340 = vst [vmem:[#allocation2] sm:$0xff] %v322
        %341 = vst [vmem:[#allocation2 + $0x8] sm:$0xff] %v327
        %342 = vst [vmem:[#allocation2 + $0x10] sm:$0xff] %v332
        %343 = vst [vmem:[#allocation2 + $0x18] sm:$0xff] %v337
        %v344 = vld [vmem:[#allocation2] sm:$0xff]
        %v345 = vld [vmem:[#allocation3] sm:$0xff]
        %v346 = vld [vmem:[#allocation3 + $0x8] sm:$0xff]
        %v347 = vld [vmem:[#allocation3 + $0x10] sm:$0xff]
        %v348 = vld [vmem:[#allocation3 + $0x18] sm:$0xff]
        %v349 = vld [vmem:[#allocation3 + $0x20] sm:$0xff]
        %v350 = vld [vmem:[#allocation3 + $0x28] sm:$0xff]
        %v351 = vld [vmem:[#allocation3 + $0x30] sm:$0xff]
        %v352 = vld [vmem:[#allocation3 + $0x38] sm:$0xff]
        %v353 = vld [vmem:[#allocation3 + $0x40] sm:$0xff]
        %v354 = vld [vmem:[#allocation3 + $0x48] sm:$0xff]
        %v355 = vld [vmem:[#allocation3 + $0x50] sm:$0xff]
        %v356 = vld [vmem:[#allocation3 + $0x58] sm:$0xff]
        %v357 = vld [vmem:[#allocation3 + $0x60] sm:$0xff]
        %v358 = vld [vmem:[#allocation3 + $0x68] sm:$0xff]
        %v359 = vld [vmem:[#allocation3 + $0x70] sm:$0xff]
        %v360 = vld [vmem:[#allocation3 + $0x78] sm:$0xff]
        %v361 = vld [vmem:[#allocation2 + $0x8] sm:$0xff]
        %v362 = vld [vmem:[#allocation3 + $0x80] sm:$0xff]
        %v363 = vld [vmem:[#allocation3 + $0x88] sm:$0xff]
        %v364 = vld [vmem:[#allocation3 + $0x90] sm:$0xff]
        %v365 = vld [vmem:[#allocation3 + $0x98] sm:$0xff]
        %v366 = vld [vmem:[#allocation3 + $0xa0] sm:$0xff]
        %v367 = vld [vmem:[#allocation3 + $0xa8] sm:$0xff]
        %v368 = vld [vmem:[#allocation3 + $0xb0] sm:$0xff]
        %v369 = vld [vmem:[#allocation3 + $0xb8] sm:$0xff]
        %v370 = vld [vmem:[#allocation3 + $0xc0] sm:$0xff]
        %v371 = vld [vmem:[#allocation3 + $0xc8] sm:$0xff]
        %v372 = vld [vmem:[#allocation3 + $0xd0] sm:$0xff]
        %v373 = vld [vmem:[#allocation3 + $0xd8] sm:$0xff]
        %v374 = vld [vmem:[#allocation3 + $0xe0] sm:$0xff]
        %v375 = vld [vmem:[#allocation3 + $0xe8] sm:$0xff]
        %v376 = vld [vmem:[#allocation3 + $0xf0] sm:$0xff]
        %v377 = vld [vmem:[#allocation3 + $0xf8] sm:$0xff]
        %378 = vmatprep.subr.mxu0 0.0
        %379 = vmatpush1.msra.mxu0 %v362
        %380 = vmatprep.subr.mxu0 0.0
        %381 = vmatpush1.msra.mxu0 %v363
        %382 = vmatprep.subr.mxu0 0.0
        %383 = vmatpush1.msra.mxu0 %v364
        %384 = vmatprep.subr.mxu0 0.0
        %385 = vmatpush1.msra.mxu0 %v365
        %386 = vmatprep.subr.mxu0 0.0
        %387 = vmatpush1.msra.mxu0 %v366
        %388 = vmatprep.subr.mxu0 0.0
        %389 = vmatpush1.msra.mxu0 %v367
        %390 = vmatprep.subr.mxu0 0.0
        %391 = vmatpush1.msra.mxu0 %v368
        %392 = vmatprep.subr.mxu0 0.0
        %393 = vmatpush1.msra.mxu0 %v369
        %394 = vmatprep.subr.mxu0 0.0
        %395 = vmatpush1.msra.mxu0 %v370
        %396 = vmatprep.subr.mxu0 0.0
        %397 = vmatpush1.msra.mxu0 %v371
        %398 = vmatprep.subr.mxu0 0.0
        %399 = vmatpush1.msra.mxu0 %v372
        %400 = vmatprep.subr.mxu0 0.0
        %401 = vmatpush1.msra.mxu0 %v373
        %402 = vmatprep.subr.mxu0 0.0
        %403 = vmatpush1.msra.mxu0 %v374
        %404 = vmatprep.subr.mxu0 0.0
        %405 = vmatpush1.msra.mxu0 %v375
        %406 = vmatprep.subr.mxu0 0.0
        %407 = vmatpush1.msra.mxu0 %v376
        %408 = vmatprep.subr.mxu0 0.0
        %409 = vmatpush1.msra.mxu0 %v377
        %410 = vmatprep.subr.mxu0 0.0
        %411 = vmatpush1.msra.mxu0 0.0
        %412 = vmatprep.subr.mxu0 0.0
        %413 = vmatpush1.msra.mxu0 0.0
        %414 = vmatprep.subr.mxu0 0.0
        %415 = vmatpush1.msra.mxu0 0.0
        %416 = vmatprep.subr.mxu0 0.0
        %417 = vmatpush1.msra.mxu0 0.0
        %418 = vmatprep.subr.mxu0 0.0
        %419 = vmatpush1.msra.mxu0 0.0
        %420 = vmatprep.subr.mxu0 0.0
        %421 = vmatpush1.msra.mxu0 0.0
        %422 = vmatprep.subr.mxu0 0.0
        %423 = vmatpush1.msra.mxu0 0.0
        %424 = vmatprep.subr.mxu0 0.0
        %425 = vmatpush1.msra.mxu0 0.0
        %426 = vmatprep.subr.mxu0 0.0
        %427 = vmatpush1.msra.mxu0 0.0
        %428 = vmatprep.subr.mxu0 0.0
        %429 = vmatpush1.msra.mxu0 0.0
        %430 = vmatprep.subr.mxu0 0.0
        %431 = vmatpush1.msra.mxu0 0.0
        %432 = vmatprep.subr.mxu0 0.0
        %433 = vmatpush1.msra.mxu0 0.0
        %434 = vmatprep.subr.mxu0 0.0
        %435 = vmatpush1.msra.mxu0 0.0
        %436 = vmatprep.subr.mxu0 0.0
        %437 = vmatpush1.msra.mxu0 0.0
        %438 = vmatprep.subr.mxu0 0.0
        %439 = vmatpush1.msra.mxu0 0.0
        %440 = vmatprep.subr.mxu0 0.0
        %441 = vmatpush1.msra.mxu0 0.0
        %442 = vmatprep.mubr.f32.mxu0 0.0
        %443 = vmatmul.mubr.f32.gmra.mrb[0].mxu0 %v361
        %v444 = vpop.f32.mrb[0].mxu0
        %v445 = vadd.f32 0.0, %v444
        %v446 = vpop.f32.mrb[0].mxu0
        %447 = vdwg.mxu0
        %448 = vmatprep.subr.mxu0 0.0
        %449 = vmatpush1.msra.mxu0 %v345
        %450 = vmatprep.subr.mxu0 0.0
        %451 = vmatpush1.msra.mxu0 %v346
        %452 = vmatprep.subr.mxu0 0.0
        %453 = vmatpush1.msra.mxu0 %v347
        %454 = vmatprep.subr.mxu0 0.0
        %455 = vmatpush1.msra.mxu0 %v348
        %456 = vmatprep.subr.mxu0 0.0
        %457 = vmatpush1.msra.mxu0 %v349
        %458 = vmatprep.subr.mxu0 0.0
        %459 = vmatpush1.msra.mxu0 %v350
        %460 = vmatprep.subr.mxu0 0.0
        %461 = vmatpush1.msra.mxu0 %v351
        %462 = vmatprep.subr.mxu0 0.0
        %463 = vmatpush1.msra.mxu0 %v352
        %464 = vmatprep.subr.mxu0 0.0
        %465 = vmatpush1.msra.mxu0 %v353
        %466 = vmatprep.subr.mxu0 0.0
        %467 = vmatpush1.msra.mxu0 %v354
        %468 = vmatprep.subr.mxu0 0.0
        %469 = vmatpush1.msra.mxu0 %v355
        %470 = vmatprep.subr.mxu0 0.0
        %471 = vmatpush1.msra.mxu0 %v356
        %472 = vmatprep.subr.mxu0 0.0
        %473 = vmatpush1.msra.mxu0 %v357
        %474 = vmatprep.subr.mxu0 0.0
        %475 = vmatpush1.msra.mxu0 %v358
        %476 = vmatprep.subr.mxu0 0.0
        %477 = vmatpush1.msra.mxu0 %v359
        %478 = vmatprep.subr.mxu0 0.0
        %479 = vmatpush1.msra.mxu0 %v360
        %480 = vmatprep.subr.mxu0 0.0
        %481 = vmatpush1.msra.mxu0 0.0
        %482 = vmatprep.subr.mxu0 0.0
        %483 = vmatpush1.msra.mxu0 0.0
        %484 = vmatprep.subr.mxu0 0.0
        %485 = vmatpush1.msra.mxu0 0.0
        %486 = vmatprep.subr.mxu0 0.0
        %487 = vmatpush1.msra.mxu0 0.0
        %488 = vmatprep.subr.mxu0 0.0
        %489 = vmatpush1.msra.mxu0 0.0
        %490 = vmatprep.subr.mxu0 0.0
        %491 = vmatpush1.msra.mxu0 0.0
        %492 = vmatprep.subr.mxu0 0.0
        %493 = vmatpush1.msra.mxu0 0.0
        %494 = vmatprep.subr.mxu0 0.0
        %495 = vmatpush1.msra.mxu0 0.0
        %496 = vmatprep.subr.mxu0 0.0
        %497 = vmatpush1.msra.mxu0 0.0
        %498 = vmatprep.subr.mxu0 0.0
        %499 = vmatpush1.msra.mxu0 0.0
        %500 = vmatprep.subr.mxu0 0.0
        %501 = vmatpush1.msra.mxu0 0.0
        %502 = vmatprep.subr.mxu0 0.0
        %503 = vmatpush1.msra.mxu0 0.0
        %504 = vmatprep.subr.mxu0 0.0
        %505 = vmatpush1.msra.mxu0 0.0
        %506 = vmatprep.subr.mxu0 0.0
        %507 = vmatpush1.msra.mxu0 0.0
        %508 = vmatprep.subr.mxu0 0.0
        %509 = vmatpush1.msra.mxu0 0.0
        %510 = vmatprep.subr.mxu0 0.0
        %511 = vmatpush1.msra.mxu0 0.0
        %512 = vmatprep.mubr.f32.mxu0 0.0
        %513 = vmatmul.mubr.f32.gmra.mrb[0].mxu0 %v344
        %v514 = vpop.f32.mrb[0].mxu0
        %v515 = vadd.f32 %v445, %v514
        %v516 = vpop.f32.mrb[0].mxu0
        %517 = vdwg.mxu0
        %v518 = vld [vmem:[#allocation2 + $0x10] sm:$0xff]
        %v519 = vld [vmem:[#allocation3 + $0x100] sm:$0xff]
        %v520 = vld [vmem:[#allocation3 + $0x108] sm:$0xff]
        %v521 = vld [vmem:[#allocation3 + $0x110] sm:$0xff]
        %v522 = vld [vmem:[#allocation3 + $0x118] sm:$0xff]
        %v523 = vld [vmem:[#allocation3 + $0x120] sm:$0xff]
        %v524 = vld [vmem:[#allocation3 + $0x128] sm:$0xff]
        %v525 = vld [vmem:[#allocation3 + $0x130] sm:$0xff]
        %v526 = vld [vmem:[#allocation3 + $0x138] sm:$0xff]
        %v527 = vld [vmem:[#allocation3 + $0x140] sm:$0xff]
        %v528 = vld [vmem:[#allocation3 + $0x148] sm:$0xff]
        %v529 = vld [vmem:[#allocation3 + $0x150] sm:$0xff]
        %v530 = vld [vmem:[#allocation3 + $0x158] sm:$0xff]
        %v531 = vld [vmem:[#allocation3 + $0x160] sm:$0xff]
        %v532 = vld [vmem:[#allocation3 + $0x168] sm:$0xff]
        %v533 = vld [vmem:[#allocation3 + $0x170] sm:$0xff]
        %v534 = vld [vmem:[#allocation3 + $0x178] sm:$0xff]
        %535 = vmatprep.subr.mxu0 0.0
        %536 = vmatpush1.msra.mxu0 %v519
        %537 = vmatprep.subr.mxu0 0.0
        %538 = vmatpush1.msra.mxu0 %v520
        %539 = vmatprep.subr.mxu0 0.0
        %540 = vmatpush1.msra.mxu0 %v521
        %541 = vmatprep.subr.mxu0 0.0
        %542 = vmatpush1.msra.mxu0 %v522
        %543 = vmatprep.subr.mxu0 0.0
        %544 = vmatpush1.msra.mxu0 %v523
        %545 = vmatprep.subr.mxu0 0.0
        %546 = vmatpush1.msra.mxu0 %v524
        %547 = vmatprep.subr.mxu0 0.0
        %548 = vmatpush1.msra.mxu0 %v525
        %549 = vmatprep.subr.mxu0 0.0
        %550 = vmatpush1.msra.mxu0 %v526
        %551 = vmatprep.subr.mxu0 0.0
        %552 = vmatpush1.msra.mxu0 %v527
        %553 = vmatprep.subr.mxu0 0.0
        %554 = vmatpush1.msra.mxu0 %v528
        %555 = vmatprep.subr.mxu0 0.0
        %556 = vmatpush1.msra.mxu0 %v529
        %557 = vmatprep.subr.mxu0 0.0
        %558 = vmatpush1.msra.mxu0 %v530
        %559 = vmatprep.subr.mxu0 0.0
        %560 = vmatpush1.msra.mxu0 %v531
        %561 = vmatprep.subr.mxu0 0.0
        %562 = vmatpush1.msra.mxu0 %v532
        %563 = vmatprep.subr.mxu0 0.0
        %564 = vmatpush1.msra.mxu0 %v533
        %565 = vmatprep.subr.mxu0 0.0
        %566 = vmatpush1.msra.mxu0 %v534
        %567 = vmatprep.subr.mxu0 0.0
        %568 = vmatpush1.msra.mxu0 0.0
        %569 = vmatprep.subr.mxu0 0.0
        %570 = vmatpush1.msra.mxu0 0.0
        %571 = vmatprep.subr.mxu0 0.0
        %572 = vmatpush1.msra.mxu0 0.0
        %573 = vmatprep.subr.mxu0 0.0
        %574 = vmatpush1.msra.mxu0 0.0
        %575 = vmatprep.subr.mxu0 0.0
        %576 = vmatpush1.msra.mxu0 0.0
        %577 = vmatprep.subr.mxu0 0.0
        %578 = vmatpush1.msra.mxu0 0.0
        %579 = vmatprep.subr.mxu0 0.0
        %580 = vmatpush1.msra.mxu0 0.0
        %581 = vmatprep.subr.mxu0 0.0
        %582 = vmatpush1.msra.mxu0 0.0
        %583 = vmatprep.subr.mxu0 0.0
        %584 = vmatpush1.msra.mxu0 0.0
        %585 = vmatprep.subr.mxu0 0.0
        %586 = vmatpush1.msra.mxu0 0.0
        %587 = vmatprep.subr.mxu0 0.0
        %588 = vmatpush1.msra.mxu0 0.0
        %589 = vmatprep.subr.mxu0 0.0
        %590 = vmatpush1.msra.mxu0 0.0
        %591 = vmatprep.subr.mxu0 0.0
        %592 = vmatpush1.msra.mxu0 0.0
        %593 = vmatprep.subr.mxu0 0.0
        %594 = vmatpush1.msra.mxu0 0.0
        %595 = vmatprep.subr.mxu0 0.0
        %596 = vmatpush1.msra.mxu0 0.0
        %597 = vmatprep.subr.mxu0 0.0
        %598 = vmatpush1.msra.mxu0 0.0
        %599 = vmatprep.mubr.f32.mxu0 0.0
        %600 = vmatmul.mubr.f32.gmra.mrb[0].mxu0 %v518
        %v601 = vpop.f32.mrb[0].mxu0
        %v602 = vadd.f32 0.0, %v601
        %v603 = vpop.f32.mrb[0].mxu0
        %604 = vdwg.mxu0
        %v605 = vadd.f32 %v515, %v602
        %v606 = vld [vmem:[#allocation2 + $0x18] sm:$0xff]
        %v607 = vld [vmem:[#allocation3 + $0x180] sm:$0xff]
        %v608 = vld [vmem:[#allocation3 + $0x188] sm:$0xff]
        %v609 = vld [vmem:[#allocation3 + $0x190] sm:$0xff]
        %v610 = vld [vmem:[#allocation3 + $0x198] sm:$0xff]
        %v611 = vld [vmem:[#allocation3 + $0x1a0] sm:$0xff]
        %v612 = vld [vmem:[#allocation3 + $0x1a8] sm:$0xff]
        %v613 = vld [vmem:[#allocation3 + $0x1b0] sm:$0xff]
        %v614 = vld [vmem:[#allocation3 + $0x1b8] sm:$0xff]
        %v615 = vld [vmem:[#allocation3 + $0x1c0] sm:$0xff]
        %v616 = vld [vmem:[#allocation3 + $0x1c8] sm:$0xff]
        %v617 = vld [vmem:[#allocation3 + $0x1d0] sm:$0xff]
        %v618 = vld [vmem:[#allocation3 + $0x1d8] sm:$0xff]
        %v619 = vld [vmem:[#allocation3 + $0x1e0] sm:$0xff]
        %v620 = vld [vmem:[#allocation3 + $0x1e8] sm:$0xff]
        %v621 = vld [vmem:[#allocation3 + $0x1f0] sm:$0xff]
        %v622 = vld [vmem:[#allocation3 + $0x1f8] sm:$0xff]
        %623 = vmatprep.subr.mxu0 0.0
        %624 = vmatpush1.msra.mxu0 %v607
        %625 = vmatprep.subr.mxu0 0.0
        %626 = vmatpush1.msra.mxu0 %v608
        %627 = vmatprep.subr.mxu0 0.0
        %628 = vmatpush1.msra.mxu0 %v609
        %629 = vmatprep.subr.mxu0 0.0
        %630 = vmatpush1.msra.mxu0 %v610
        %631 = vmatprep.subr.mxu0 0.0
        %632 = vmatpush1.msra.mxu0 %v611
        %633 = vmatprep.subr.mxu0 0.0
        %634 = vmatpush1.msra.mxu0 %v612
        %635 = vmatprep.subr.mxu0 0.0
        %636 = vmatpush1.msra.mxu0 %v613
        %637 = vmatprep.subr.mxu0 0.0
        %638 = vmatpush1.msra.mxu0 %v614
        %639 = vmatprep.subr.mxu0 0.0
        %640 = vmatpush1.msra.mxu0 %v615
        %641 = vmatprep.subr.mxu0 0.0
        %642 = vmatpush1.msra.mxu0 %v616
        %643 = vmatprep.subr.mxu0 0.0
        %644 = vmatpush1.msra.mxu0 %v617
        %645 = vmatprep.subr.mxu0 0.0
        %646 = vmatpush1.msra.mxu0 %v618
        %647 = vmatprep.subr.mxu0 0.0
        %648 = vmatpush1.msra.mxu0 %v619
        %649 = vmatprep.subr.mxu0 0.0
        %650 = vmatpush1.msra.mxu0 %v620
        %651 = vmatprep.subr.mxu0 0.0
        %652 = vmatpush1.msra.mxu0 %v621
        %653 = vmatprep.subr.mxu0 0.0
        %654 = vmatpush1.msra.mxu0 %v622
        %655 = vmatprep.subr.mxu0 0.0
        %656 = vmatpush1.msra.mxu0 0.0
        %657 = vmatprep.subr.mxu0 0.0
        %658 = vmatpush1.msra.mxu0 0.0
        %659 = vmatprep.subr.mxu0 0.0
        %660 = vmatpush1.msra.mxu0 0.0
        %661 = vmatprep.subr.mxu0 0.0
        %662 = vmatpush1.msra.mxu0 0.0
        %663 = vmatprep.subr.mxu0 0.0
        %664 = vmatpush1.msra.mxu0 0.0
        %665 = vmatprep.subr.mxu0 0.0
        %666 = vmatpush1.msra.mxu0 0.0
        %667 = vmatprep.subr.mxu0 0.0
        %668 = vmatpush1.msra.mxu0 0.0
        %669 = vmatprep.subr.mxu0 0.0
        %670 = vmatpush1.msra.mxu0 0.0
        %671 = vmatprep.subr.mxu0 0.0
        %672 = vmatpush1.msra.mxu0 0.0
        %673 = vmatprep.subr.mxu0 0.0
        %674 = vmatpush1.msra.mxu0 0.0
        %675 = vmatprep.subr.mxu0 0.0
        %676 = vmatpush1.msra.mxu0 0.0
        %677 = vmatprep.subr.mxu0 0.0
        %678 = vmatpush1.msra.mxu0 0.0
        %679 = vmatprep.subr.mxu0 0.0
        %680 = vmatpush1.msra.mxu0 0.0
        %681 = vmatprep.subr.mxu0 0.0
        %682 = vmatpush1.msra.mxu0 0.0
        %683 = vmatprep.subr.mxu0 0.0
        %684 = vmatpush1.msra.mxu0 0.0
        %685 = vmatprep.subr.mxu0 0.0
        %686 = vmatpush1.msra.mxu0 0.0
        %687 = vmatprep.mubr.f32.mxu0 0.0
        %688 = vmatmul.mubr.f32.gmra.mrb[0].mxu0 %v606
        %v689 = vpop.f32.mrb[0].mxu0
        %v690 = vadd.f32 0.0, %v689
        %v691 = vpop.f32.mrb[0].mxu0
        %692 = vdwg.mxu0
        %v693 = vadd.f32 %v605, %v690
        %v694 = vld [vmem:[%s3] sm:$0xff]
        %696 = vset.pattern.permute.xlu0 0
        %697 = vperm.xlu0 %696, %v694
        %v698 = vpop.permute.xlu0 %697
        %v700 = vadd.f32 %v693, %v698
        %v701 = vmax.f32 %v700, 0.0
        %702 = vst [vmem:[%s225] sm:$0xff] %v701
        %s703 = sand.u32 %s132, 1
        %s704 = scalar_lea.sflag [#allocation5], %s703
        %s705 = sand.u32 %s132, 1
        %s706 = smul.addr %s705, 8
        %s707 = scalar_lea.vmem [#allocation6], %s706
        // Predicated region
        $region41: #{tpu_custom_call.1} parent=35 // pred_check
          %p708 = pneg %p142
        $region42: #{tpu_custom_call.1} parent=35 // pred_check_branch
          %710 = sbr.rel (%p708) target = $region44
        $region43: #{tpu_custom_call.1} parent=35 // pred_region
          %s712 = ssub.s32 128, 128
          %713 = vsyncadd %s704, %s712
          %s714 = sadd.s32 %s24, %s23
          %s715 = smul.addr %s714, 128
          %s716 = scalar_lea.hbm %s4, %s715
          %s718 = sshll.u32 %s707, 4
          %s719 = int_to_ptr.vmem [resolvable:$true] %s718
          %721 = dma.vmem_to_hbm [thread:$0]  %s719, 128, %s716, %s704
        $region44: #{tpu_custom_call.1} parent=35 // pred_fallthru
          _
      $region36: #{tpu_custom_call.1} parent=5 // pred_fallthru
        _
      %p722 = scmp.le.s32.totalorder 2, %s14
      // Predicated region
      $region45: #{tpu_custom_call.1} parent=5 // pred_check
        %p723 = pneg %p722
      $region46: #{tpu_custom_call.1} parent=5 // pred_check_branch
        %725 = sbr.rel (%p723) target = $region48
      $region47: #{tpu_custom_call.1} parent=5 // pred_region
        %s726 = ssub.s32 %s14, 2
        // Predicated region
        $region49: #{tpu_custom_call.1} parent=47 // pred_check
          %p727 = pneg %p148
        $region50: #{tpu_custom_call.1} parent=47 // pred_check_branch
          %729 = sbr.rel (%p727) target = $region52
        $region51: #{tpu_custom_call.1} parent=47 // pred_region
          %s730 = sand.u32 %s133, 1
          %s731 = scalar_lea.sflag [#allocation5], %s730
          %s732 = sand.u32 %s133, 1
          %s733 = smul.addr %s732, 8
          %s734 = scalar_lea.vmem [#allocation6], %s733
          %735 = dma.done %s731, 128
        $region52: #{tpu_custom_call.1} parent=47 // pred_fallthru
          _
      $region48: #{tpu_custom_call.1} parent=5 // pred_fallthru
        _
    $region6: #{tpu_custom_call.1} parent=1 // loop_footer
      %s18 = sadd.s32 1, %s14
    $region7: #{tpu_custom_call.1} parent=1 // loop_footer_branch
      %13 = sbr.rel target = $region3
    $region8: #{tpu_custom_call.1} parent=1 // loop_exit
      _
    %736 = vsyncpa [#allocation4], 1
    %s737 = scalar_lea.sflag [#allocation4], 1
    %738 = vsyncpa %s737, 1
    %739 = vsyncpa [#allocation5], 1
    %s740 = scalar_lea.sflag [#allocation5], 1
    %741 = vsyncpa %s740, 1

// kernel: tpu_custom_call.1
$region0: #{tpu_custom_call.1}
  #allocation0 [shape = 'u32[]', space=smem, size = 0x4, offset = 0x4, fixed_abs, tag = 'smem constant byte address 0x4 - core index']
  #allocation1 [shape = 'u32[144,128]{1,0:T(1,128)}', space=vmem, size = 0x12000, scoped, tag = 'internal scratch']
  #allocation2 [shape = 'f32[32,128]{1,0:T(8,128)}', space=vmem, size = 0x4000, scoped, tag = 'scratch operand']
  %s0 = inlined_call_operand.vmem [shape: f32[2,4,128], index: 0, kind: input, shape index: {}]
  %s1 = inlined_call_operand.vmem [shape: f32[32,4], index: 1, kind: input, shape index: {}]
  %s2 = inlined_call_operand.hbm [shape: f32[512,128], index: 2, kind: input, shape index: {}]
  %s3 = inlined_call_operand.vmem [shape: f32[8,1], index: 3, kind: input, shape index: {}]
  %s4 = inlined_call_operand.hbm [shape: f32[2,8,128], index: 4, kind: output, shape index: {}]
  %s5 = sld [smem:[#allocation0]]
  $region53: #{tpu_custom_call.1} parent=0
    _
  %s7 = ssub.s32 1, %s5
  %s8 = scalar_select 0, %s7, %s5
  $region1: #{tpu_custom_call.1} parent=0
    #allocation3 [shape = 'u8[262144]{0}', space=vmem, size = 0x40000, scoped, tag = 'input window, operand 2, single buffered']
    #allocation4 [shape = 's32[2]{0}', space=sflag, size = 0x8, scoped, tag = 'scoped memory for tpu_custom_call.1']
    #allocation5 [shape = 's32[2]{0}', space=sflag, size = 0x8, scoped, tag = 'scoped memory for tpu_custom_call.1']
    #allocation6 [shape = 'u8[8192]{0}', space=vmem, size = 0x2000, scoped, tag = 'output window, operand 0']
    %9 = vsyncpa [#allocation4], 0
    %10 = vsyncpa [#allocation5], 0
    %s11 = scalar_lea.sflag [#allocation5], 1
    %12 = vsyncpa %s11, 0
    loop: start=0, step=1, limit=4
    $region2: #{tpu_custom_call.1} parent=1 // loop_pre_header
      _
    $region3: #{tpu_custom_call.1} parent=1 // loop_header
      %s14 = sphi 0, %s18
      %p15 = scmp.ge.s32.totalorder %s14, 4
      %s21 = sphi 0, %s33
      %s22 = sphi 0, %s29
      %s23 = sphi 0, %s21
      %s24 = sphi 0, %s22
      %s25 = sphi 0, %s23
      %s26 = sphi 0, %s24
      %s38 = sphi 0, %s40
      %s41 = sphi 0, %s38
      %s42 = sphi 0, %s41
      %s58 = sphi 0, %s42
      %s62 = sphi 0, %s62
      %s64 = sphi 0, %s62
      %s65 = sphi 0, %s64
      %s79 = sphi 0, %s65
      %s83 = sphi 0, %s83
      %s85 = sphi 0, %s83
      %s86 = sphi 0, %s85
      %s100 = sphi 0, %s86
      %s104 = sphi 0, %s104
      %s106 = sphi 0, %s104
      %s107 = sphi 0, %s106
      %s121 = sphi 0, %s107
      %s129 = sphi 0, %s131
      %s132 = sphi 0, %s129
      %s133 = sphi 0, %s132
      %s149 = sphi 0, %s133
    $region4: #{tpu_custom_call.1} parent=1 // loop_header_branch
      %17 = sbr.rel (%p15) target = $region8
    $region5: #{tpu_custom_call.1} parent=1 // loop_body
      %s19 = ssub.s32 %s14, 1
      %s20 = ssub.s32 %s14, 2
      %s27 = sadd.s32 1, %s22
      %p28 = scmp.ge.s32.totalorder %s27, 1
      %s29 = scalar_select %p28, 0, %s27
      %s30 = sadd.s32 1, %s21
      %s31 = scalar_select %p28, %s30, %s21
      %p32 = scmp.ge.s32.totalorder %s31, 2
      %s33 = scalar_select %p32, 0, %s31
      %s34 = ssub.s32 %s21, %s33
      %s35 = ssub.s32 %s22, %s29
      %s36 = sor.u32 %s34, %s35
      %p37 = scmp.eq.s32.totalorder %s36, 0
      %s39 = sadd.s32 %s38, 1
      %s40 = scalar_select %p37, %s38, %s39
      %p43 = pneg %p37
      %p44 = scmp.eq.s32.totalorder %s14, 1
      %p45 = por %p43, %p44
      %p46 = scmp.ne.s32.totalorder %s38, %s41
      %p47 = scmp.eq.s32.totalorder %s14, 0
      %p48 = por %p46, %p47
      %p49 = scmp.ne.s32.totalorder %s38, %s41
      %p50 = scmp.eq.s32.totalorder %s19, 1
      %p51 = por %p49, %p50
      %p52 = scmp.ne.s32.totalorder %s41, %s42
      %p53 = scmp.eq.s32.totalorder %s19, 0
      %p54 = por %p52, %p53
      %p55 = scmp.ne.s32.totalorder %s41, %s42
      %p56 = scmp.eq.s32.totalorder %s20, 1
      %p57 = por %p55, %p56
      %p59 = scmp.ne.s32.totalorder %s42, %s58
      %p60 = scmp.eq.s32.totalorder %s20, 0
      %p61 = por %p59, %p60
      %s63 = sadd.s32 %s62, 1
      %p66 = scmp.eq.s32.totalorder %s14, 1
      %p67 = scmp.ne.s32.totalorder %s62, %s64
      %p68 = scmp.eq.s32.totalorder %s14, 0
      %p69 = por %p67, %p68
      %p70 = scmp.ne.s32.totalorder %s62, %s64
      %p71 = scmp.eq.s32.totalorder %s19, 1
      %p72 = por %p70, %p71
      %p73 = scmp.ne.s32.totalorder %s64, %s65
      %p74 = scmp.eq.s32.totalorder %s19, 0
      %p75 = por %p73, %p74
      %p76 = scmp.ne.s32.totalorder %s64, %s65
      %p77 = scmp.eq.s32.totalorder %s20, 1
      %p78 = por %p76, %p77
      %p80 = scmp.ne.s32.totalorder %s65, %s79
      %p81 = scmp.eq.s32.totalorder %s20, 0
      %p82 = por %p80, %p81
      %s84 = sadd.s32 %s83, 1
      %p87 = scmp.eq.s32.totalorder %s14, 1
      %p88 = scmp.ne.s32.totalorder %s83, %s85
      %p89 = scmp.eq.s32.totalorder %s14, 0
      %p90 = por %p88, %p89
      %p91 = scmp.ne.s32.totalorder %s83, %s85
      %p92 = scmp.eq.s32.totalorder %s19, 1
      %p93 = por %p91, %p92
      %p94 = scmp.ne.s32.totalorder %s85, %s86
      %p95 = scmp.eq.s32.totalorder %s19, 0
      %p96 = por %p94, %p95
      %p97 = scmp.ne.s32.totalorder %s85, %s86
      %p98 = scmp.eq.s32.totalorder %s20, 1
      %p99 = por %p97, %p98
      %p101 = scmp.ne.s32.totalorder %s86, %s100
      %p102 = scmp.eq.s32.totalorder %s20, 0
      %p103 = por %p101, %p102
      %s105 = sadd.s32 %s104, 1
      %p108 = scmp.eq.s32.totalorder %s14, 1
      %p109 = scmp.ne.s32.totalorder %s104, %s106
      %p110 = scmp.eq.s32.totalorder %s14, 0
      %p111 = por %p109, %p110
      %p112 = scmp.ne.s32.totalorder %s104, %s106
      %p113 = scmp.eq.s32.totalorder %s19, 1
      %p114 = por %p112, %p113
      %p115 = scmp.ne.s32.totalorder %s106, %s107
      %p116 = scmp.eq.s32.totalorder %s19, 0
      %p117 = por %p115, %p116
      %p118 = scmp.ne.s32.totalorder %s106, %s107
      %p119 = scmp.eq.s32.totalorder %s20, 1
      %p120 = por %p118, %p119
      %p122 = scmp.ne.s32.totalorder %s107, %s121
      %p123 = scmp.eq.s32.totalorder %s20, 0
      %p124 = por %p122, %p123
      %s125 = ssub.s32 %s21, %s33
      %s126 = ssub.s32 %s22, %s29
      %s127 = sor.u32 %s125, %s126
      %p128 = scmp.eq.s32.totalorder %s127, 0
      %s130 = sadd.s32 %s129, 1
      %s131 = scalar_select %p128, %s129, %s130
      %p134 = pneg %p128
      %p135 = scmp.eq.s32.totalorder %s14, 1
      %p136 = por %p134, %p135
      %p137 = scmp.ne.s32.totalorder %s129, %s132
      %p138 = scmp.eq.s32.totalorder %s14, 0
      %p139 = por %p137, %p138
      %p140 = scmp.ne.s32.totalorder %s129, %s132
      %p141 = scmp.eq.s32.totalorder %s19, 1
      %p142 = por %p140, %p141
      %p143 = scmp.ne.s32.totalorder %s132, %s133
      %p144 = scmp.eq.s32.totalorder %s19, 0
      %p145 = por %p143, %p144
      %p146 = scmp.ne.s32.totalorder %s132, %s133
      %p147 = scmp.eq.s32.totalorder %s20, 1
      %p148 = por %p146, %p147
      %p150 = scmp.ne.s32.totalorder %s133, %s149
      %p151 = scmp.eq.s32.totalorder %s20, 0
      %p152 = por %p150, %p151
      %p153 = scmp.le.s32.totalorder 1, %s14
      %p154 = scmp.lt.s32.totalorder %s14, 3
      %p155 = pnand %p153, %p154
      %p156 = pneg %p155
      // Predicated region
      $region9: #{tpu_custom_call.1} parent=5 // pred_check
        _
      $region10: #{tpu_custom_call.1} parent=5 // pred_check_branch
        %158 = sbr.rel (%p155) target = $region12
      $region11: #{tpu_custom_call.1} parent=5 // pred_region
        %s159 = ssub.s32 %s14, 1
        // Predicated region
        $region13: #{tpu_custom_call.1} parent=11 // pred_check
          %p160 = pneg %p75
        $region14: #{tpu_custom_call.1} parent=11 // pred_check_branch
          %162 = sbr.rel (%p160) target = $region16
        $region15: #{tpu_custom_call.1} parent=11 // pred_region
          _
        $region16: #{tpu_custom_call.1} parent=11 // pred_fallthru
          _
        // Predicated region
        $region17: #{tpu_custom_call.1} parent=11 // pred_check
          %p163 = pneg %p96
        $region18: #{tpu_custom_call.1} parent=11 // pred_check_branch
          %165 = sbr.rel (%p163) target = $region20
        $region19: #{tpu_custom_call.1} parent=11 // pred_region
          %s167 = ssub.s32 8192, 8192
          %168 = vsyncadd [#allocation4], %s167
          %s169 = sshll.u32 [#allocation3], 4
          %s170 = int_to_ptr.vmem [resolvable:$true] %s169
          %175 = dma.hbm_to_vmem [thread:$0]  %s2, 8192, %s170, [#allocation4], 128, 128, 8
        $region20: #{tpu_custom_call.1} parent=11 // pred_fallthru
          _
        // Predicated region
        $region21: #{tpu_custom_call.1} parent=11 // pred_check
          %p176 = pneg %p117
        $region22: #{tpu_custom_call.1} parent=11 // pred_check_branch
          %178 = sbr.rel (%p176) target = $region24
        $region23: #{tpu_custom_call.1} parent=11 // pred_region
          _
        $region24: #{tpu_custom_call.1} parent=11 // pred_fallthru
          _
      $region12: #{tpu_custom_call.1} parent=5 // pred_fallthru
        _
      %p179 = scmp.lt.s32.totalorder %s14, 2
      // Predicated region
      $region25: #{tpu_custom_call.1} parent=5 // pred_check
        %p180 = pneg %p179
      $region26: #{tpu_custom_call.1} parent=5 // pred_check_branch
        %182 = sbr.rel (%p180) target = $region28
      $region27: #{tpu_custom_call.1} parent=5 // pred_region
        // Predicated region
        $region29: #{tpu_custom_call.1} parent=27 // pred_check
          %p183 = pneg %p48
        $region30: #{tpu_custom_call.1} parent=27 // pred_check_branch
          %185 = sbr.rel (%p183) target = $region32
        $region31: #{tpu_custom_call.1} parent=27 // pred_region
          %p186 = scmp.lt.s32.totalorder %s21, 1
          %s187 = scalar_select %p186, %s21, 1
          %p188 = scmp.lt.s32.totalorder %s22, 0
          %s189 = scalar_select %p188, %s22, 0
          %s190 = sadd.s32 %s189, %s187
          %s191 = smul.addr %s190, 4
          %s192 = scalar_lea.vmem %s0, %s191
        $region32: #{tpu_custom_call.1} parent=27 // pred_fallthru
          _
      $region28: #{tpu_custom_call.1} parent=5 // pred_fallthru
        _
      %p193 = scmp.le.s32.totalorder 1, %s14
      %p194 = scmp.lt.s32.totalorder %s14, 3
      %p195 = pnand %p193, %p194
      %p196 = pneg %p195
      // Predicated region
      $region33: #{tpu_custom_call.1} parent=5 // pred_check
        _
      $region34: #{tpu_custom_call.1} parent=5 // pred_check_branch
        %198 = sbr.rel (%p195) target = $region36
      $region35: #{tpu_custom_call.1} parent=5 // pred_region
        %s199 = ssub.s32 %s14, 1
        // Predicated region
        $region37: #{tpu_custom_call.1} parent=35 // pred_check
          %p200 = pneg %p96
        $region38: #{tpu_custom_call.1} parent=35 // pred_check_branch
          %202 = sbr.rel (%p200) target = $region40
        $region39: #{tpu_custom_call.1} parent=35 // pred_region
          %203 = dma.done [#allocation4], 8192
        $region40: #{tpu_custom_call.1} parent=35 // pred_fallthru
          _
        %p204 = scmp.lt.s32.totalorder %s23, 1
        %s205 = scalar_select %p204, %s23, 1
        %p206 = scmp.lt.s32.totalorder %s24, 0
        %s207 = scalar_select %p206, %s24, 0
        %s208 = sadd.s32 %s207, %s205
        %s209 = smul.addr %s208, 4
        %s210 = scalar_lea.vmem %s0, %s209
        %p211 = pneg %p54
        %p212 = pneg %p51
        %p213 = pneg %p75
        %p214 = pneg %p72
        %p215 = pneg %p96
        %p216 = pneg %p93
        %p217 = pneg %p117
        %p218 = pneg %p114
        %p219 = pneg %p145
        %p220 = pneg %p142
        %s221 = sand.u32 %s132, 1
        %s222 = scalar_lea.sflag [#allocation5], %s221
        %s223 = sand.u32 %s132, 1
        %s224 = smul.addr %s223, 8
        %s225 = scalar_lea.vmem [#allocation6], %s224
        %p226 = scmp.lt.s32.totalorder %s23, 1
        %s227 = scalar_select %p226, %s23, 1
        %p228 = scmp.lt.s32.totalorder %s24, 0
        %s229 = scalar_select %p228, %s24, 0
        %s230 = sadd.s32 %s229, %s227
        %s231 = smul.addr %s230, 4
        %s232 = scalar_lea.vmem %s0, %s231
        %v233 = vld [vmem:[%s1] sm:$0xff]
        %v234 = vld [vmem:[%s1 + $0x8] sm:$0xff]
        %v235 = vld [vmem:[%s1 + $0x10] sm:$0xff]
        %v236 = vld [vmem:[%s1 + $0x18] sm:$0xff]
        %v237 = vld [vmem:[%s232] sm:$0xf]
        %vm238 = vcmask 31744
        %v240 = vsel %vm238, %v233, 0
        %v243 = vsel %vm238, %v234, 0
        %v246 = vsel %vm238, %v235, 0
        %v249 = vsel %vm238, %v236, 0
        %vm251 = vcmask 1043456
        %v253 = vsel %vm251, %v237, 0
        %255 = vmatprep.subr.mxu0 0.0
        %256 = vmatpush1.msra.mxu0 %v253
        %257 = vmatprep.subr.mxu0 0.0
        %258 = vmatpush1.msra.mxu0 0.0
        %259 = vmatprep.subr.mxu0 0.0
        %260 = vmatpush1.msra.mxu0 0.0
        %261 = vmatprep.subr.mxu0 0.0
        %262 = vmatpush1.msra.mxu0 0.0
        %263 = vmatprep.subr.mxu0 0.0
        %264 = vmatpush1.msra.mxu0 0.0
        %265 = vmatprep.subr.mxu0 0.0
        %266 = vmatpush1.msra.mxu0 0.0
        %267 = vmatprep.subr.mxu0 0.0
        %268 = vmatpush1.msra.mxu0 0.0
        %269 = vmatprep.subr.mxu0 0.0
        %270 = vmatpush1.msra.mxu0 0.0
        %271 = vmatprep.subr.mxu0 0.0
        %272 = vmatpush1.msra.mxu0 0.0
        %273 = vmatprep.subr.mxu0 0.0
        %274 = vmatpush1.msra.mxu0 0.0
        %275 = vmatprep.subr.mxu0 0.0
        %276 = vmatpush1.msra.mxu0 0.0
        %277 = vmatprep.subr.mxu0 0.0
        %278 = vmatpush1.msra.mxu0 0.0
        %279 = vmatprep.subr.mxu0 0.0
        %280 = vmatpush1.msra.mxu0 0.0
        %281 = vmatprep.subr.mxu0 0.0
        %282 = vmatpush1.msra.mxu0 0.0
        %283 = vmatprep.subr.mxu0 0.0
        %284 = vmatpush1.msra.mxu0 0.0
        %285 = vmatprep.subr.mxu0 0.0
        %286 = vmatpush1.msra.mxu0 0.0
        %287 = vmatprep.subr.mxu0 0.0
        %288 = vmatpush1.msra.mxu0 0.0
        %289 = vmatprep.subr.mxu0 0.0
        %290 = vmatpush1.msra.mxu0 0.0
        %291 = vmatprep.subr.mxu0 0.0
        %292 = vmatpush1.msra.mxu0 0.0
        %293 = vmatprep.subr.mxu0 0.0
        %294 = vmatpush1.msra.mxu0 0.0
        %295 = vmatprep.subr.mxu0 0.0
        %296 = vmatpush1.msra.mxu0 0.0
        %297 = vmatprep.subr.mxu0 0.0
        %298 = vmatpush1.msra.mxu0 0.0
        %299 = vmatprep.subr.mxu0 0.0
        %300 = vmatpush1.msra.mxu0 0.0
        %301 = vmatprep.subr.mxu0 0.0
        %302 = vmatpush1.msra.mxu0 0.0
        %303 = vmatprep.subr.mxu0 0.0
        %304 = vmatpush1.msra.mxu0 0.0
        %305 = vmatprep.subr.mxu0 0.0
        %306 = vmatpush1.msra.mxu0 0.0
        %307 = vmatprep.subr.mxu0 0.0
        %308 = vmatpush1.msra.mxu0 0.0
        %309 = vmatprep.subr.mxu0 0.0
        %310 = vmatpush1.msra.mxu0 0.0
        %311 = vmatprep.subr.mxu0 0.0
        %312 = vmatpush1.msra.mxu0 0.0
        %313 = vmatprep.subr.mxu0 0.0
        %314 = vmatpush1.msra.mxu0 0.0
        %315 = vmatprep.subr.mxu0 0.0
        %316 = vmatpush1.msra.mxu0 0.0
        %317 = vmatprep.subr.mxu0 0.0
        %318 = vmatpush1.msra.mxu0 0.0
        %319 = vmatprep.mubr.f32.mxu0 0.0
        %320 = vmatmul.mubr.f32.gmra.mrb[0].mxu0 %v240
        %v321 = vpop.f32.mrb[0].mxu0
        %v322 = vadd.f32 0.0, %v321
        %v323 = vpop.f32.mrb[0].mxu0
        %324 = vmatprep.mubr.f32.mxu0 0.0
        %325 = vmatmul.mubr.f32.gmra.mrb[0].mxu0 %v243
        %v326 = vpop.f32.mrb[0].mxu0
        %v327 = vadd.f32 0.0, %v326
        %v328 = vpop.f32.mrb[0].mxu0
        %329 = vmatprep.mubr.f32.mxu0 0.0
        %330 = vmatmul.mubr.f32.gmra.mrb[0].mxu0 %v246
        %v331 = vpop.f32.mrb[0].mxu0
        %v332 = vadd.f32 0.0, %v331
        %v333 = vpop.f32.mrb[0].mxu0
        %334 = vmatprep.mubr.f32.mxu0 0.0
        %335 = vmatmul.mubr.f32.gmra.mrb[0].mxu0 %v249
        %v336 = vpop.f32.mrb[0].mxu0
        %v337 = vadd.f32 0.0, %v336
        %v338 = vpop.f32.mrb[0].mxu0
        %339 = vdwg.mxu0
        %340 = vst [vmem:[#allocation2] sm:$0xff] %v322
        %341 = vst [vmem:[#allocation2 + $0x8] sm:$0xff] %v327
        %342 = vst [vmem:[#allocation2 + $0x10] sm:$0xff] %v332
        %343 = vst [vmem:[#allocation2 + $0x18] sm:$0xff] %v337
        %v344 = vld [vmem:[#allocation2] sm:$0xff]
        %v345 = vld [vmem:[#allocation3] sm:$0xff]
        %v346 = vld [vmem:[#allocation3 + $0x8] sm:$0xff]
        %v347 = vld [vmem:[#allocation3 + $0x10] sm:$0xff]
        %v348 = vld [vmem:[#allocation3 + $0x18] sm:$0xff]
        %v349 = vld [vmem:[#allocation3 + $0x20] sm:$0xff]
        %v350 = vld [vmem:[#allocation3 + $0x28] sm:$0xff]
        %v351 = vld [vmem:[#allocation3 + $0x30] sm:$0xff]
        %v352 = vld [vmem:[#allocation3 + $0x38] sm:$0xff]
        %v353 = vld [vmem:[#allocation3 + $0x40] sm:$0xff]
        %v354 = vld [vmem:[#allocation3 + $0x48] sm:$0xff]
        %v355 = vld [vmem:[#allocation3 + $0x50] sm:$0xff]
        %v356 = vld [vmem:[#allocation3 + $0x58] sm:$0xff]
        %v357 = vld [vmem:[#allocation3 + $0x60] sm:$0xff]
        %v358 = vld [vmem:[#allocation3 + $0x68] sm:$0xff]
        %v359 = vld [vmem:[#allocation3 + $0x70] sm:$0xff]
        %v360 = vld [vmem:[#allocation3 + $0x78] sm:$0xff]
        %v361 = vld [vmem:[#allocation2 + $0x8] sm:$0xff]
        %v362 = vld [vmem:[#allocation3 + $0x80] sm:$0xff]
        %v363 = vld [vmem:[#allocation3 + $0x88] sm:$0xff]
        %v364 = vld [vmem:[#allocation3 + $0x90] sm:$0xff]
        %v365 = vld [vmem:[#allocation3 + $0x98] sm:$0xff]
        %v366 = vld [vmem:[#allocation3 + $0xa0] sm:$0xff]
        %v367 = vld [vmem:[#allocation3 + $0xa8] sm:$0xff]
        %v368 = vld [vmem:[#allocation3 + $0xb0] sm:$0xff]
        %v369 = vld [vmem:[#allocation3 + $0xb8] sm:$0xff]
        %v370 = vld [vmem:[#allocation3 + $0xc0] sm:$0xff]
        %v371 = vld [vmem:[#allocation3 + $0xc8] sm:$0xff]
        %v372 = vld [vmem:[#allocation3 + $0xd0] sm:$0xff]
        %v373 = vld [vmem:[#allocation3 + $0xd8] sm:$0xff]
        %v374 = vld [vmem:[#allocation3 + $0xe0] sm:$0xff]
        %v375 = vld [vmem:[#allocation3 + $0xe8] sm:$0xff]
        %v376 = vld [vmem:[#allocation3 + $0xf0] sm:$0xff]
        %v377 = vld [vmem:[#allocation3 + $0xf8] sm:$0xff]
        %378 = vmatprep.subr.mxu0 0.0
        %379 = vmatpush1.msra.mxu0 %v362
        %380 = vmatprep.subr.mxu0 0.0
        %381 = vmatpush1.msra.mxu0 %v363
        %382 = vmatprep.subr.mxu0 0.0
        %383 = vmatpush1.msra.mxu0 %v364
        %384 = vmatprep.subr.mxu0 0.0
        %385 = vmatpush1.msra.mxu0 %v365
        %386 = vmatprep.subr.mxu0 0.0
        %387 = vmatpush1.msra.mxu0 %v366
        %388 = vmatprep.subr.mxu0 0.0
        %389 = vmatpush1.msra.mxu0 %v367
        %390 = vmatprep.subr.mxu0 0.0
        %391 = vmatpush1.msra.mxu0 %v368
        %392 = vmatprep.subr.mxu0 0.0
        %393 = vmatpush1.msra.mxu0 %v369
        %394 = vmatprep.subr.mxu0 0.0
        %395 = vmatpush1.msra.mxu0 %v370
        %396 = vmatprep.subr.mxu0 0.0
        %397 = vmatpush1.msra.mxu0 %v371
        %398 = vmatprep.subr.mxu0 0.0
        %399 = vmatpush1.msra.mxu0 %v372
        %400 = vmatprep.subr.mxu0 0.0
        %401 = vmatpush1.msra.mxu0 %v373
        %402 = vmatprep.subr.mxu0 0.0
        %403 = vmatpush1.msra.mxu0 %v374
        %404 = vmatprep.subr.mxu0 0.0
        %405 = vmatpush1.msra.mxu0 %v375
        %406 = vmatprep.subr.mxu0 0.0
        %407 = vmatpush1.msra.mxu0 %v376
        %408 = vmatprep.subr.mxu0 0.0
        %409 = vmatpush1.msra.mxu0 %v377
        %410 = vmatprep.subr.mxu0 0.0
        %411 = vmatpush1.msra.mxu0 0.0
        %412 = vmatprep.subr.mxu0 0.0
        %413 = vmatpush1.msra.mxu0 0.0
        %414 = vmatprep.subr.mxu0 0.0
        %415 = vmatpush1.msra.mxu0 0.0
        %416 = vmatprep.subr.mxu0 0.0
        %417 = vmatpush1.msra.mxu0 0.0
        %418 = vmatprep.subr.mxu0 0.0
        %419 = vmatpush1.msra.mxu0 0.0
        %420 = vmatprep.subr.mxu0 0.0
        %421 = vmatpush1.msra.mxu0 0.0
        %422 = vmatprep.subr.mxu0 0.0
        %423 = vmatpush1.msra.mxu0 0.0
        %424 = vmatprep.subr.mxu0 0.0
        %425 = vmatpush1.msra.mxu0 0.0
        %426 = vmatprep.subr.mxu0 0.0
        %427 = vmatpush1.msra.mxu0 0.0
        %428 = vmatprep.subr.mxu0 0.0
        %429 = vmatpush1.msra.mxu0 0.0
        %430 = vmatprep.subr.mxu0 0.0
        %431 = vmatpush1.msra.mxu0 0.0
        %432 = vmatprep.subr.mxu0 0.0
        %433 = vmatpush1.msra.mxu0 0.0
        %434 = vmatprep.subr.mxu0 0.0
        %435 = vmatpush1.msra.mxu0 0.0
        %436 = vmatprep.subr.mxu0 0.0
        %437 = vmatpush1.msra.mxu0 0.0
        %438 = vmatprep.subr.mxu0 0.0
        %439 = vmatpush1.msra.mxu0 0.0
        %440 = vmatprep.subr.mxu0 0.0
        %441 = vmatpush1.msra.mxu0 0.0
        %442 = vmatprep.mubr.f32.mxu0 0.0
        %443 = vmatmul.mubr.f32.gmra.mrb[0].mxu0 %v361
        %v444 = vpop.f32.mrb[0].mxu0
        %v445 = vadd.f32 0.0, %v444
        %v446 = vpop.f32.mrb[0].mxu0
        %447 = vdwg.mxu0
        %448 = vmatprep.subr.mxu0 0.0
        %449 = vmatpush1.msra.mxu0 %v345
        %450 = vmatprep.subr.mxu0 0.0
        %451 = vmatpush1.msra.mxu0 %v346
        %452 = vmatprep.subr.mxu0 0.0
        %453 = vmatpush1.msra.mxu0 %v347
        %454 = vmatprep.subr.mxu0 0.0
        %455 = vmatpush1.msra.mxu0 %v348
        %456 = vmatprep.subr.mxu0 0.0
        %457 = vmatpush1.msra.mxu0 %v349
        %458 = vmatprep.subr.mxu0 0.0
        %459 = vmatpush1.msra.mxu0 %v350
        %460 = vmatprep.subr.mxu0 0.0
        %461 = vmatpush1.msra.mxu0 %v351
        %462 = vmatprep.subr.mxu0 0.0
        %463 = vmatpush1.msra.mxu0 %v352
        %464 = vmatprep.subr.mxu0 0.0
        %465 = vmatpush1.msra.mxu0 %v353
        %466 = vmatprep.subr.mxu0 0.0
        %467 = vmatpush1.msra.mxu0 %v354
        %468 = vmatprep.subr.mxu0 0.0
        %469 = vmatpush1.msra.mxu0 %v355
        %470 = vmatprep.subr.mxu0 0.0
        %471 = vmatpush1.msra.mxu0 %v356
        %472 = vmatprep.subr.mxu0 0.0
        %473 = vmatpush1.msra.mxu0 %v357
        %474 = vmatprep.subr.mxu0 0.0
        %475 = vmatpush1.msra.mxu0 %v358
        %476 = vmatprep.subr.mxu0 0.0
        %477 = vmatpush1.msra.mxu0 %v359
        %478 = vmatprep.subr.mxu0 0.0
        %479 = vmatpush1.msra.mxu0 %v360
        %480 = vmatprep.subr.mxu0 0.0
        %481 = vmatpush1.msra.mxu0 0.0
        %482 = vmatprep.subr.mxu0 0.0
        %483 = vmatpush1.msra.mxu0 0.0
        %484 = vmatprep.subr.mxu0 0.0
        %485 = vmatpush1.msra.mxu0 0.0
        %486 = vmatprep.subr.mxu0 0.0
        %487 = vmatpush1.msra.mxu0 0.0
        %488 = vmatprep.subr.mxu0 0.0
        %489 = vmatpush1.msra.mxu0 0.0
        %490 = vmatprep.subr.mxu0 0.0
        %491 = vmatpush1.msra.mxu0 0.0
        %492 = vmatprep.subr.mxu0 0.0
        %493 = vmatpush1.msra.mxu0 0.0
        %494 = vmatprep.subr.mxu0 0.0
        %495 = vmatpush1.msra.mxu0 0.0
        %496 = vmatprep.subr.mxu0 0.0
        %497 = vmatpush1.msra.mxu0 0.0
        %498 = vmatprep.subr.mxu0 0.0
        %499 = vmatpush1.msra.mxu0 0.0
        %500 = vmatprep.subr.mxu0 0.0
        %501 = vmatpush1.msra.mxu0 0.0
        %502 = vmatprep.subr.mxu0 0.0
        %503 = vmatpush1.msra.mxu0 0.0
        %504 = vmatprep.subr.mxu0 0.0
        %505 = vmatpush1.msra.mxu0 0.0
        %506 = vmatprep.subr.mxu0 0.0
        %507 = vmatpush1.msra.mxu0 0.0
        %508 = vmatprep.subr.mxu0 0.0
        %509 = vmatpush1.msra.mxu0 0.0
        %510 = vmatprep.subr.mxu0 0.0
        %511 = vmatpush1.msra.mxu0 0.0
        %512 = vmatprep.mubr.f32.mxu0 0.0
        %513 = vmatmul.mubr.f32.gmra.mrb[0].mxu0 %v344
        %v514 = vpop.f32.mrb[0].mxu0
        %v515 = vadd.f32 %v445, %v514
        %v516 = vpop.f32.mrb[0].mxu0
        %517 = vdwg.mxu0
        %v518 = vld [vmem:[#allocation2 + $0x10] sm:$0xff]
        %v519 = vld [vmem:[#allocation3 + $0x100] sm:$0xff]
        %v520 = vld [vmem:[#allocation3 + $0x108] sm:$0xff]
        %v521 = vld [vmem:[#allocation3 + $0x110] sm:$0xff]
        %v522 = vld [vmem:[#allocation3 + $0x118] sm:$0xff]
        %v523 = vld [vmem:[#allocation3 + $0x120] sm:$0xff]
        %v524 = vld [vmem:[#allocation3 + $0x128] sm:$0xff]
        %v525 = vld [vmem:[#allocation3 + $0x130] sm:$0xff]
        %v526 = vld [vmem:[#allocation3 + $0x138] sm:$0xff]
        %v527 = vld [vmem:[#allocation3 + $0x140] sm:$0xff]
        %v528 = vld [vmem:[#allocation3 + $0x148] sm:$0xff]
        %v529 = vld [vmem:[#allocation3 + $0x150] sm:$0xff]
        %v530 = vld [vmem:[#allocation3 + $0x158] sm:$0xff]
        %v531 = vld [vmem:[#allocation3 + $0x160] sm:$0xff]
        %v532 = vld [vmem:[#allocation3 + $0x168] sm:$0xff]
        %v533 = vld [vmem:[#allocation3 + $0x170] sm:$0xff]
        %v534 = vld [vmem:[#allocation3 + $0x178] sm:$0xff]
        %535 = vmatprep.subr.mxu0 0.0
        %536 = vmatpush1.msra.mxu0 %v519
        %537 = vmatprep.subr.mxu0 0.0
        %538 = vmatpush1.msra.mxu0 %v520
        %539 = vmatprep.subr.mxu0 0.0
        %540 = vmatpush1.msra.mxu0 %v521
        %541 = vmatprep.subr.mxu0 0.0
        %542 = vmatpush1.msra.mxu0 %v522
        %543 = vmatprep.subr.mxu0 0.0
        %544 = vmatpush1.msra.mxu0 %v523
        %545 = vmatprep.subr.mxu0 0.0
        %546 = vmatpush1.msra.mxu0 %v524
        %547 = vmatprep.subr.mxu0 0.0
        %548 = vmatpush1.msra.mxu0 %v525
        %549 = vmatprep.subr.mxu0 0.0
        %550 = vmatpush1.msra.mxu0 %v526
        %551 = vmatprep.subr.mxu0 0.0
        %552 = vmatpush1.msra.mxu0 %v527
        %553 = vmatprep.subr.mxu0 0.0
        %554 = vmatpush1.msra.mxu0 %v528
        %555 = vmatprep.subr.mxu0 0.0
        %556 = vmatpush1.msra.mxu0 %v529
        %557 = vmatprep.subr.mxu0 0.0
        %558 = vmatpush1.msra.mxu0 %v530
        %559 = vmatprep.subr.mxu0 0.0
        %560 = vmatpush1.msra.mxu0 %v531
        %561 = vmatprep.subr.mxu0 0.0
        %562 = vmatpush1.msra.mxu0 %v532
        %563 = vmatprep.subr.mxu0 0.0
        %564 = vmatpush1.msra.mxu0 %v533
        %565 = vmatprep.subr.mxu0 0.0
        %566 = vmatpush1.msra.mxu0 %v534
        %567 = vmatprep.subr.mxu0 0.0
        %568 = vmatpush1.msra.mxu0 0.0
        %569 = vmatprep.subr.mxu0 0.0
        %570 = vmatpush1.msra.mxu0 0.0
        %571 = vmatprep.subr.mxu0 0.0
        %572 = vmatpush1.msra.mxu0 0.0
        %573 = vmatprep.subr.mxu0 0.0
        %574 = vmatpush1.msra.mxu0 0.0
        %575 = vmatprep.subr.mxu0 0.0
        %576 = vmatpush1.msra.mxu0 0.0
        %577 = vmatprep.subr.mxu0 0.0
        %578 = vmatpush1.msra.mxu0 0.0
        %579 = vmatprep.subr.mxu0 0.0
        %580 = vmatpush1.msra.mxu0 0.0
        %581 = vmatprep.subr.mxu0 0.0
        %582 = vmatpush1.msra.mxu0 0.0
        %583 = vmatprep.subr.mxu0 0.0
        %584 = vmatpush1.msra.mxu0 0.0
        %585 = vmatprep.subr.mxu0 0.0
        %586 = vmatpush1.msra.mxu0 0.0
        %587 = vmatprep.subr.mxu0 0.0
        %588 = vmatpush1.msra.mxu0 0.0
        %589 = vmatprep.subr.mxu0 0.0
        %590 = vmatpush1.msra.mxu0 0.0
        %591 = vmatprep.subr.mxu0 0.0
        %592 = vmatpush1.msra.mxu0 0.0
        %593 = vmatprep.subr.mxu0 0.0
        %594 = vmatpush1.msra.mxu0 0.0
        %595 = vmatprep.subr.mxu0 0.0
        %596 = vmatpush1.msra.mxu0 0.0
        %597 = vmatprep.subr.mxu0 0.0
        %598 = vmatpush1.msra.mxu0 0.0
        %599 = vmatprep.mubr.f32.mxu0 0.0
        %600 = vmatmul.mubr.f32.gmra.mrb[0].mxu0 %v518
        %v601 = vpop.f32.mrb[0].mxu0
        %v602 = vadd.f32 0.0, %v601
        %v603 = vpop.f32.mrb[0].mxu0
        %604 = vdwg.mxu0
        %v605 = vadd.f32 %v515, %v602
        %v606 = vld [vmem:[#allocation2 + $0x18] sm:$0xff]
        %v607 = vld [vmem:[#allocation3 + $0x180] sm:$0xff]
        %v608 = vld [vmem:[#allocation3 + $0x188] sm:$0xff]
        %v609 = vld [vmem:[#allocation3 + $0x190] sm:$0xff]
        %v610 = vld [vmem:[#allocation3 + $0x198] sm:$0xff]
        %v611 = vld [vmem:[#allocation3 + $0x1a0] sm:$0xff]
        %v612 = vld [vmem:[#allocation3 + $0x1a8] sm:$0xff]
        %v613 = vld [vmem:[#allocation3 + $0x1b0] sm:$0xff]
        %v614 = vld [vmem:[#allocation3 + $0x1b8] sm:$0xff]
        %v615 = vld [vmem:[#allocation3 + $0x1c0] sm:$0xff]
        %v616 = vld [vmem:[#allocation3 + $0x1c8] sm:$0xff]
        %v617 = vld [vmem:[#allocation3 + $0x1d0] sm:$0xff]
        %v618 = vld [vmem:[#allocation3 + $0x1d8] sm:$0xff]
        %v619 = vld [vmem:[#allocation3 + $0x1e0] sm:$0xff]
        %v620 = vld [vmem:[#allocation3 + $0x1e8] sm:$0xff]
        %v621 = vld [vmem:[#allocation3 + $0x1f0] sm:$0xff]
        %v622 = vld [vmem:[#allocation3 + $0x1f8] sm:$0xff]
        %623 = vmatprep.subr.mxu0 0.0
        %624 = vmatpush1.msra.mxu0 %v607
        %625 = vmatprep.subr.mxu0 0.0
        %626 = vmatpush1.msra.mxu0 %v608
        %627 = vmatprep.subr.mxu0 0.0
        %628 = vmatpush1.msra.mxu0 %v609
        %629 = vmatprep.subr.mxu0 0.0
        %630 = vmatpush1.msra.mxu0 %v610
        %631 = vmatprep.subr.mxu0 0.0
        %632 = vmatpush1.msra.mxu0 %v611
        %633 = vmatprep.subr.mxu0 0.0
        %634 = vmatpush1.msra.mxu0 %v612
        %635 = vmatprep.subr.mxu0 0.0
        %636 = vmatpush1.msra.mxu0 %v613
        %637 = vmatprep.subr.mxu0 0.0
        %638 = vmatpush1.msra.mxu0 %v614
        %639 = vmatprep.subr.mxu0 0.0
        %640 = vmatpush1.msra.mxu0 %v615
        %641 = vmatprep.subr.mxu0 0.0
        %642 = vmatpush1.msra.mxu0 %v616
        %643 = vmatprep.subr.mxu0 0.0
        %644 = vmatpush1.msra.mxu0 %v617
        %645 = vmatprep.subr.mxu0 0.0
        %646 = vmatpush1.msra.mxu0 %v618
        %647 = vmatprep.subr.mxu0 0.0
        %648 = vmatpush1.msra.mxu0 %v619
        %649 = vmatprep.subr.mxu0 0.0
        %650 = vmatpush1.msra.mxu0 %v620
        %651 = vmatprep.subr.mxu0 0.0
        %652 = vmatpush1.msra.mxu0 %v621
        %653 = vmatprep.subr.mxu0 0.0
        %654 = vmatpush1.msra.mxu0 %v622
        %655 = vmatprep.subr.mxu0 0.0
        %656 = vmatpush1.msra.mxu0 0.0
        %657 = vmatprep.subr.mxu0 0.0
        %658 = vmatpush1.msra.mxu0 0.0
        %659 = vmatprep.subr.mxu0 0.0
        %660 = vmatpush1.msra.mxu0 0.0
        %661 = vmatprep.subr.mxu0 0.0
        %662 = vmatpush1.msra.mxu0 0.0
        %663 = vmatprep.subr.mxu0 0.0
        %664 = vmatpush1.msra.mxu0 0.0
        %665 = vmatprep.subr.mxu0 0.0
        %666 = vmatpush1.msra.mxu0 0.0
        %667 = vmatprep.subr.mxu0 0.0
        %668 = vmatpush1.msra.mxu0 0.0
        %669 = vmatprep.subr.mxu0 0.0
        %670 = vmatpush1.msra.mxu0 0.0
        %671 = vmatprep.subr.mxu0 0.0
        %672 = vmatpush1.msra.mxu0 0.0
        %673 = vmatprep.subr.mxu0 0.0
        %674 = vmatpush1.msra.mxu0 0.0
        %675 = vmatprep.subr.mxu0 0.0
        %676 = vmatpush1.msra.mxu0 0.0
        %677 = vmatprep.subr.mxu0 0.0
        %678 = vmatpush1.msra.mxu0 0.0
        %679 = vmatprep.subr.mxu0 0.0
        %680 = vmatpush1.msra.mxu0 0.0
        %681 = vmatprep.subr.mxu0 0.0
        %682 = vmatpush1.msra.mxu0 0.0
        %683 = vmatprep.subr.mxu0 0.0
        %684 = vmatpush1.msra.mxu0 0.0
        %685 = vmatprep.subr.mxu0 0.0
        %686 = vmatpush1.msra.mxu0 0.0
        %687 = vmatprep.mubr.f32.mxu0 0.0
        %688 = vmatmul.mubr.f32.gmra.mrb[0].mxu0 %v606
        %v689 = vpop.f32.mrb[0].mxu0
        %v690 = vadd.f32 0.0, %v689
        %v691 = vpop.f32.mrb[0].mxu0
        %692 = vdwg.mxu0
        %v693 = vadd.f32 %v605, %v690
        %v694 = vld [vmem:[%s3] sm:$0xff]
        %696 = vset.pattern.permute.xlu0 0
        %697 = vperm.xlu0 %696, %v694
        %v698 = vpop.permute.xlu0 %697
        %v700 = vadd.f32 %v693, %v698
        %v701 = vmax.f32 %v700, 0.0
        %702 = vst [vmem:[%s225] sm:$0xff] %v701
        %s703 = sand.u32 %s132, 1
        %s704 = scalar_lea.sflag [#allocation5], %s703
        %s705 = sand.u32 %s132, 1
        %s706 = smul.addr %s705, 8
        %s707 = scalar_lea.vmem [#allocation6], %s706
        // Predicated region
        $region41: #{tpu_custom_call.1} parent=35 // pred_check
          %p708 = pneg %p142
        $region42: #{tpu_custom_call.1} parent=35 // pred_check_branch
          %710 = sbr.rel (%p708) target = $region44
        $region43: #{tpu_custom_call.1} parent=35 // pred_region
          %s712 = ssub.s32 128, 128
          %713 = vsyncadd %s704, %s712
          %s714 = sadd.s32 %s24, %s23
          %s715 = smul.addr %s714, 128
          %s716 = scalar_lea.hbm %s4, %s715
          %s718 = sshll.u32 %s707, 4
          %s719 = int_to_ptr.vmem [resolvable:$true] %s718
          %721 = dma.vmem_to_hbm [thread:$0]  %s719, 128, %s716, %s704
        $region44: #{tpu_custom_call.1} parent=35 // pred_fallthru
          _
      $region36: #{tpu_custom_call.1} parent=5 // pred_fallthru
        _
      %p722 = scmp.le.s32.totalorder 2, %s14
      // Predicated region
      $region45: #{tpu_custom_call.1} parent=5 // pred_check
        %p723 = pneg %p722
      $region46: #{tpu_custom_call.1} parent=5 // pred_check_branch
        %725 = sbr.rel (%p723) target = $region48
      $region47: #{tpu_custom_call.1} parent=5 // pred_region
        %s726 = ssub.s32 %s14, 2
        // Predicated region
        $region49: #{tpu_custom_call.1} parent=47 // pred_check
          %p727 = pneg %p148
        $region50: #{tpu_custom_call.1} parent=47 // pred_check_branch
          %729 = sbr.rel (%p727) target = $region52
        $region51: #{tpu_custom_call.1} parent=47 // pred_region
          %s730 = sand.u32 %s133, 1
          %s731 = scalar_lea.sflag [#allocation5], %s730
          %s732 = sand.u32 %s133, 1
          %s733 = smul.addr %s732, 8
          %s734 = scalar_lea.vmem [#allocation6], %s733
          %735 = dma.done %s731, 128
        $region52: #{tpu_custom_call.1} parent=47 // pred_fallthru
          _
      $region48: #{tpu_custom_call.1} parent=5 // pred_fallthru
        _
    $region6: #{tpu_custom_call.1} parent=1 // loop_footer
      %s18 = sadd.s32 1, %s14
    $region7: #{tpu_custom_call.1} parent=1 // loop_footer_branch
      %13 = sbr.rel target = $region3
    $region8: #{tpu_custom_call.1} parent=1 // loop_exit
      _
    %736 = vsyncpa [#allocation4], 1
    %s737 = scalar_lea.sflag [#allocation4], 1
    %738 = vsyncpa %s737, 1
    %739 = vsyncpa [#allocation5], 1
    %s740 = scalar_lea.sflag [#allocation5], 1
    %741 = vsyncpa %s740, 1

</llo_original>
